<compile_context>
chip_gen: v7x
topology: tpu7x:2x2x1
jax: 0.10.0
libtpu: 0.0.40
codegen_flags: <defaults>
</compile_context>

<pallas_src>
import functools

import jax
import jax.numpy as jnp
from jax.experimental import pallas as pl
from jax.experimental.pallas import tpu as pltpu

# ------------------------------ configuration ------------------------------
PROMPT_LEN = 4            # prompt_len (module asserts prompt_len > 0)
N_CLS_CTX  = 4            # learnable per-class tokens ("X X X X")
CTX_DIM    = 512          # CLIP text width
TOTAL_TOK  = 77           # CLIP context length

PREFIX_LEN = 5                                  # embedding[:, :5]
MIDDLE_LEN = 2                                  # embedding[:, 9:11]
SUFFIX_LEN = TOTAL_TOK - (PROMPT_LEN + 11)      # embedding[:, prompt_len+11:]

# token offsets in the assembled prompt
OFF_CLS    = PREFIX_LEN                         # 5
OFF_MIDDLE = OFF_CLS + N_CLS_CTX                # 9
assert PREFIX_LEN + N_CLS_CTX + MIDDLE_LEN + PROMPT_LEN + SUFFIX_LEN == TOTAL_TOK

_SMALL_BATCH_CUTOFF = 8   # below this, plain XLA gather+concat wins


# -------------------------------- kernel -----------------------------------
def _prompt_kernel(label_ref,      # SMEM scalar-prefetch: (b_pad,) int32
                   template_ref,   # (77, 512)                VMEM-resident
                   cls_ctx_ref,    # (num_class, 4, 512)      VMEM-resident
                   out_ref,        # (block_b, 77, 512)       this step's rows
                   *, block_b, num_class):
    base = pl.program_id(0) * block_b
    tmpl = template_ref[...]                              # (77, 512)
    for r in range(block_b):                              # short unrolled loop
        lab = label_ref[base + r]
        lab = jnp.minimum(jnp.maximum(lab, 0), num_class - 1)   # guard OOB labels
        # full lane-dense 77-row store of the pre-merged template ...
        out_ref[r, :, :] = tmpl
        # ... then overwrite rows 5:9 with this row's class context.
        out_ref[r, OFF_CLS:OFF_MIDDLE, :] = cls_ctx_ref[lab]


def _pallas_prompts(label, template, cls_ctx, *, block_b):
    """Batched Pallas path. label: (b,) int32, template: (77,512)."""
    b = label.shape[0]
    num_class = cls_ctx.shape[0]
    num_steps = pl.cdiv(b, block_b)
    b_pad = num_steps * block_b
    if b_pad != b:
        label = jnp.pad(label, (0, b_pad - b))            # padded rows use label 0

    grid_spec = pltpu.PrefetchScalarGridSpec(
        num_scalar_prefetch=1,                            # labels land in SMEM
        grid=(num_steps,),
        in_specs=[
            # merged template: same block every step -> DMA'd once, VMEM resident
            pl.BlockSpec((TOTAL_TOK, CTX_DIM), lambda i, lab: (0, 0)),
            # whole class-context table resident in VMEM; gather happens in-kernel
            pl.BlockSpec((num_class, N_CLS_CTX, CTX_DIM), lambda i, lab: (0, 0, 0)),
        ],
        out_specs=pl.BlockSpec((block_b, TOTAL_TOK, CTX_DIM),
                               lambda i, lab: (i, 0, 0)),
    )
    kernel = functools.partial(_prompt_kernel, block_b=block_b, num_class=num_class)
    out = pl.pallas_call(
        kernel,
        out_shape=jax.ShapeDtypeStruct((b_pad, TOTAL_TOK, CTX_DIM), cls_ctx.dtype),
        grid_spec=grid_spec,
        compiler_params=pltpu.CompilerParams(
            dimension_semantics=("parallel",)),           # steps independent (v7x: 2 TCs)
    )(label.astype(jnp.int32), template, cls_ctx)
    return out[:b] if b_pad != b else out


@functools.partial(jax.jit, static_argnames=("block_b",))
def prompt_learner_forward(label, cls_ctx, token_prefix, token_middle,
                           suffix_prompt, token_suffix, block_b=16):
    """PromptLearner_Learnable2.forward(label) -> (b, 77, 512) prompts.

    Static buffers are 2-D: token_prefix (5,512), token_middle (2,512),
    suffix_prompt (prompt_len,512), token_suffix (rest,512).
    """
    dtype = cls_ctx.dtype
    b = label.shape[0]
    token_prefix  = token_prefix.astype(dtype)
    token_middle  = token_middle.astype(dtype)
    suffix_prompt = suffix_prompt.astype(dtype)
    token_suffix  = token_suffix.astype(dtype)

    # Pre-merge the static pieces into a single (77, 512) template;
    # rows 5:9 are placeholders overwritten by the per-row class context.
    template = jnp.concatenate([
        token_prefix,
        jnp.zeros((N_CLS_CTX, CTX_DIM), dtype),
        token_middle,
        suffix_prompt,
        token_suffix,
    ], axis=0)
    assert template.shape == (TOTAL_TOK, CTX_DIM)

    if b <= _SMALL_BATCH_CUTOFF:
        # Tiny batch: XLA gather + concat is already bandwidth-limited and
        # avoids the custom-call launch overhead.
        lab = jnp.clip(label, 0, cls_ctx.shape[0] - 1)
        return jnp.concatenate([
            jnp.broadcast_to(token_prefix[None], (b, PREFIX_LEN, CTX_DIM)),
            cls_ctx[lab],
            jnp.broadcast_to(token_middle[None], (b, MIDDLE_LEN, CTX_DIM)),
            jnp.broadcast_to(suffix_prompt[None], (b, PROMPT_LEN, CTX_DIM)),
            jnp.broadcast_to(token_suffix[None], (b, SUFFIX_LEN, CTX_DIM)),
        ], axis=1)

    # Keep >=2 grid steps when possible (v7x megacore), cap block for VMEM.
    eff_block_b = max(1, min(block_b, pl.cdiv(b, 2)))
    return _pallas_prompts(label, template, cls_ctx, block_b=eff_block_b)


# -------------------------------- driver ------------------------------------
if __name__ == "__main__":
    NUM_CLASS = 10
    key = jax.random.PRNGKey(0)
    k_emb, k_cls, k_suf, k_lab1, k_lab2 = jax.random.split(key, 5)

    # TODO(synk): the real __init__ builds `embedding` from clip.tokenize(ctx_init)
    # + the frozen CLIP token_embedding; the `clip` package is not available here,
    # so a deterministic random (1, 77, 512) stand-in with identical slicing is used.
    embedding = 0.02 * jax.random.normal(k_emb, (1, TOTAL_TOK, CTX_DIM), jnp.float32)
    token_prefix = embedding[0, :PREFIX_LEN, :]          # register_buffer token_prefix
    token_middle = embedding[0, 9:11, :]                 # register_buffer token_middle
    token_suffix = embedding[0, PROMPT_LEN + 11:, :]     # register_buffer token_suffix

    # nn.Parameter inits (std=0.02 normal, as in the module)
    cls_ctx = 0.02 * jax.random.normal(
        k_cls, (NUM_CLASS, N_CLS_CTX, CTX_DIM), jnp.float32)
    suffix_prompt = 0.02 * jax.random.normal(
        k_suf, (1, PROMPT_LEN, CTX_DIM), jnp.float32)[0]

    def reference(label):
        b = label.shape[0]
        return jnp.concatenate([
            jnp.broadcast_to(token_prefix[None], (b, PREFIX_LEN, CTX_DIM)),
            cls_ctx[label],
            jnp.broadcast_to(token_middle[None], (b, MIDDLE_LEN, CTX_DIM)),
            jnp.broadcast_to(suffix_prompt[None], (b, PROMPT_LEN, CTX_DIM)),
            jnp.broadcast_to(token_suffix[None], (b, SUFFIX_LEN, CTX_DIM)),
        ], axis=1)

    # --- Pallas path: batch large enough to exercise the batched kernel -----
    B = 32
    label = jax.random.randint(k_lab1, (B,), 0, NUM_CLASS, jnp.int32)
    prompts = prompt_learner_forward(label, cls_ctx, token_prefix, token_middle,
                                     suffix_prompt, token_suffix)
    jax.block_until_ready(prompts)
    assert prompts.shape == (B, TOTAL_TOK, CTX_DIM)
    err = float(jnp.max(jnp.abs(prompts - reference(label))))
    assert err == 0.0, err

    # --- tiny-batch fallback path (XLA gather+concat) ------------------------
    B2 = 2
    label2 = jax.random.randint(k_lab2, (B2,), 0, NUM_CLASS, jnp.int32)
    prompts2 = prompt_learner_forward(label2, cls_ctx, token_prefix, token_middle,
                                      suffix_prompt, token_suffix)
    jax.block_until_ready(prompts2)
    assert prompts2.shape == (B2, TOTAL_TOK, CTX_DIM)
    err2 = float(jnp.max(jnp.abs(prompts2 - reference(label2))))
    assert err2 == 0.0, err2

    print("KERNEL_OK")
</pallas_src>

<mosaic_0001>
module attributes {stable_mosaic.version = 11 : i64} {
  func.func @_prompt_kernel(%arg0: i32, %arg1: memref<32xi32, #tpu.memory_space<smem>>, %arg2: memref<77x512xf32, #tpu.memory_space<vmem>>, %arg3: memref<10x4x512xf32, #tpu.memory_space<vmem>>, %arg4: memref<16x77x512xf32, #tpu.memory_space<vmem>>) attributes {dimension_semantics = [#tpu.dimension_semantics<parallel>], iteration_bounds = array<i64: 2>, scalar_prefetch = 1 : i64, scratch_operands = 0 : i64, tpu.core_type = #tpu.core_type<tc>, window_params = [{pipeline_mode = #tpu.pipeline_mode<synchronous>, transform_indices = @transform_0, window_bounds = array<i64: 77, 512>}, {pipeline_mode = #tpu.pipeline_mode<synchronous>, transform_indices = @transform_1, window_bounds = array<i64: 10, 4, 512>}, {transform_indices = @transform_2, window_bounds = array<i64: 16, 77, 512>}]} {
    %c16_i32 = arith.constant 16 : i32
    %0 = arith.muli %arg0, %c16_i32 : i32
    %c0 = arith.constant 0 : index
    %c0_0 = arith.constant 0 : index
    %1 = vector.load %arg2[%c0, %c0_0] : memref<77x512xf32, #tpu.memory_space<vmem>>, vector<77x512xf32>
    %c0_i32 = arith.constant 0 : i32
    %2 = arith.addi %0, %c0_i32 : i32
    %3 = arith.index_cast %2 : i32 to index
    %4 = memref.load %arg1[%3] : memref<32xi32, #tpu.memory_space<smem>>
    %c0_i32_1 = arith.constant 0 : i32
    %5 = arith.maxsi %4, %c0_i32_1 : i32
    %c9_i32 = arith.constant 9 : i32
    %6 = arith.minsi %5, %c9_i32 : i32
    %c0_2 = arith.constant 0 : index
    %c0_3 = arith.constant 0 : index
    %c0_4 = arith.constant 0 : index
    %7 = vector.load %arg4[%c0_2, %c0_3, %c0_4] : memref<16x77x512xf32, #tpu.memory_space<vmem>>, vector<1x77x512xf32>
    %8 = vector.shape_cast %7 : vector<1x77x512xf32> to vector<77x512xf32>
    %9 = vector.shape_cast %1 : vector<77x512xf32> to vector<1x77x512xf32>
    tpu.vector_store %arg4[%c0_2, %c0_3, %c0_4], %9 {strides = array<i32>} : memref<16x77x512xf32, #tpu.memory_space<vmem>>, vector<1x77x512xf32>,
    %10 = arith.index_cast %6 : i32 to index
    %c0_5 = arith.constant 0 : index
    %c0_6 = arith.constant 0 : index
    %11 = vector.load %arg3[%10, %c0_5, %c0_6] : memref<10x4x512xf32, #tpu.memory_space<vmem>>, vector<1x4x512xf32>
    %12 = vector.shape_cast %11 : vector<1x4x512xf32> to vector<4x512xf32>
    %c0_7 = arith.constant 0 : index
    %c5 = arith.constant 5 : index
    %c0_8 = arith.constant 0 : index
    %13 = vector.load %arg4[%c0_7, %c5, %c0_8] : memref<16x77x512xf32, #tpu.memory_space<vmem>>, vector<1x4x512xf32>
    %14 = vector.shape_cast %13 : vector<1x4x512xf32> to vector<4x512xf32>
    %15 = vector.shape_cast %12 : vector<4x512xf32> to vector<1x4x512xf32>
    tpu.vector_store %arg4[%c0_7, %c5, %c0_8], %15 {strides = array<i32>} : memref<16x77x512xf32, #tpu.memory_space<vmem>>, vector<1x4x512xf32>,
    %c1_i32 = arith.constant 1 : i32
    %16 = arith.addi %0, %c1_i32 : i32
    %17 = arith.index_cast %16 : i32 to index
    %18 = memref.load %arg1[%17] : memref<32xi32, #tpu.memory_space<smem>>
    %c0_i32_9 = arith.constant 0 : i32
    %19 = arith.maxsi %18, %c0_i32_9 : i32
    %c9_i32_10 = arith.constant 9 : i32
    %20 = arith.minsi %19, %c9_i32_10 : i32
    %c1 = arith.constant 1 : index
    %c0_11 = arith.constant 0 : index
    %c0_12 = arith.constant 0 : index
    %21 = vector.load %arg4[%c1, %c0_11, %c0_12] : memref<16x77x512xf32, #tpu.memory_space<vmem>>, vector<1x77x512xf32>
    %22 = vector.shape_cast %21 : vector<1x77x512xf32> to vector<77x512xf32>
    %23 = vector.shape_cast %1 : vector<77x512xf32> to vector<1x77x512xf32>
    tpu.vector_store %arg4[%c1, %c0_11, %c0_12], %23 {strides = array<i32>} : memref<16x77x512xf32, #tpu.memory_space<vmem>>, vector<1x77x512xf32>,
    %24 = arith.index_cast %20 : i32 to index
    %c0_13 = arith.constant 0 : index
    %c0_14 = arith.constant 0 : index
    %25 = vector.load %arg3[%24, %c0_13, %c0_14] : memref<10x4x512xf32, #tpu.memory_space<vmem>>, vector<1x4x512xf32>
    %26 = vector.shape_cast %25 : vector<1x4x512xf32> to vector<4x512xf32>
    %c1_15 = arith.constant 1 : index
    %c5_16 = arith.constant 5 : index
    %c0_17 = arith.constant 0 : index
    %27 = vector.load %arg4[%c1_15, %c5_16, %c0_17] : memref<16x77x512xf32, #tpu.memory_space<vmem>>, vector<1x4x512xf32>
    %28 = vector.shape_cast %27 : vector<1x4x512xf32> to vector<4x512xf32>
    %29 = vector.shape_cast %26 : vector<4x512xf32> to vector<1x4x512xf32>
    tpu.vector_store %arg4[%c1_15, %c5_16, %c0_17], %29 {strides = array<i32>} : memref<16x77x512xf32, #tpu.memory_space<vmem>>, vector<1x4x512xf32>,
    %c2_i32 = arith.constant 2 : i32
    %30 = arith.addi %0, %c2_i32 : i32
    %31 = arith.index_cast %30 : i32 to index
    %32 = memref.load %arg1[%31] : memref<32xi32, #tpu.memory_space<smem>>
    %c0_i32_18 = arith.constant 0 : i32
    %33 = arith.maxsi %32, %c0_i32_18 : i32
    %c9_i32_19 = arith.constant 9 : i32
    %34 = arith.minsi %33, %c9_i32_19 : i32
    %c2 = arith.constant 2 : index
    %c0_20 = arith.constant 0 : index
    %c0_21 = arith.constant 0 : index
    %35 = vector.load %arg4[%c2, %c0_20, %c0_21] : memref<16x77x512xf32, #tpu.memory_space<vmem>>, vector<1x77x512xf32>
    %36 = vector.shape_cast %35 : vector<1x77x512xf32> to vector<77x512xf32>
    %37 = vector.shape_cast %1 : vector<77x512xf32> to vector<1x77x512xf32>
    tpu.vector_store %arg4[%c2, %c0_20, %c0_21], %37 {strides = array<i32>} : memref<16x77x512xf32, #tpu.memory_space<vmem>>, vector<1x77x512xf32>,
    %38 = arith.index_cast %34 : i32 to index
    %c0_22 = arith.constant 0 : index
    %c0_23 = arith.constant 0 : index
    %39 = vector.load %arg3[%38, %c0_22, %c0_23] : memref<10x4x512xf32, #tpu.memory_space<vmem>>, vector<1x4x512xf32>
    %40 = vector.shape_cast %39 : vector<1x4x512xf32> to vector<4x512xf32>
    %c2_24 = arith.constant 2 : index
    %c5_25 = arith.constant 5 : index
    %c0_26 = arith.constant 0 : index
    %41 = vector.load %arg4[%c2_24, %c5_25, %c0_26] : memref<16x77x512xf32, #tpu.memory_space<vmem>>, vector<1x4x512xf32>
    %42 = vector.shape_cast %41 : vector<1x4x512xf32> to vector<4x512xf32>
    %43 = vector.shape_cast %40 : vector<4x512xf32> to vector<1x4x512xf32>
    tpu.vector_store %arg4[%c2_24, %c5_25, %c0_26], %43 {strides = array<i32>} : memref<16x77x512xf32, #tpu.memory_space<vmem>>, vector<1x4x512xf32>,
    %c3_i32 = arith.constant 3 : i32
    %44 = arith.addi %0, %c3_i32 : i32
    %45 = arith.index_cast %44 : i32 to index
    %46 = memref.load %arg1[%45] : memref<32xi32, #tpu.memory_space<smem>>
    %c0_i32_27 = arith.constant 0 : i32
    %47 = arith.maxsi %46, %c0_i32_27 : i32
    %c9_i32_28 = arith.constant 9 : i32
    %48 = arith.minsi %47, %c9_i32_28 : i32
    %c3 = arith.constant 3 : index
    %c0_29 = arith.constant 0 : index
    %c0_30 = arith.constant 0 : index
    %49 = vector.load %arg4[%c3, %c0_29, %c0_30] : memref<16x77x512xf32, #tpu.memory_space<vmem>>, vector<1x77x512xf32>
    %50 = vector.shape_cast %49 : vector<1x77x512xf32> to vector<77x512xf32>
    %51 = vector.shape_cast %1 : vector<77x512xf32> to vector<1x77x512xf32>
    tpu.vector_store %arg4[%c3, %c0_29, %c0_30], %51 {strides = array<i32>} : memref<16x77x512xf32, #tpu.memory_space<vmem>>, vector<1x77x512xf32>,
    %52 = arith.index_cast %48 : i32 to index
    %c0_31 = arith.constant 0 : index
    %c0_32 = arith.constant 0 : index
    %53 = vector.load %arg3[%52, %c0_31, %c0_32] : memref<10x4x512xf32, #tpu.memory_space<vmem>>, vector<1x4x512xf32>
    %54 = vector.shape_cast %53 : vector<1x4x512xf32> to vector<4x512xf32>
    %c3_33 = arith.constant 3 : index
    %c5_34 = arith.constant 5 : index
    %c0_35 = arith.constant 0 : index
    %55 = vector.load %arg4[%c3_33, %c5_34, %c0_35] : memref<16x77x512xf32, #tpu.memory_space<vmem>>, vector<1x4x512xf32>
    %56 = vector.shape_cast %55 : vector<1x4x512xf32> to vector<4x512xf32>
    %57 = vector.shape_cast %54 : vector<4x512xf32> to vector<1x4x512xf32>
    tpu.vector_store %arg4[%c3_33, %c5_34, %c0_35], %57 {strides = array<i32>} : memref<16x77x512xf32, #tpu.memory_space<vmem>>, vector<1x4x512xf32>,
    %c4_i32 = arith.constant 4 : i32
    %58 = arith.addi %0, %c4_i32 : i32
    %59 = arith.index_cast %58 : i32 to index
    %60 = memref.load %arg1[%59] : memref<32xi32, #tpu.memory_space<smem>>
    %c0_i32_36 = arith.constant 0 : i32
    %61 = arith.maxsi %60, %c0_i32_36 : i32
    %c9_i32_37 = arith.constant 9 : i32
    %62 = arith.minsi %61, %c9_i32_37 : i32
    %c4 = arith.constant 4 : index
    %c0_38 = arith.constant 0 : index
    %c0_39 = arith.constant 0 : index
    %63 = vector.load %arg4[%c4, %c0_38, %c0_39] : memref<16x77x512xf32, #tpu.memory_space<vmem>>, vector<1x77x512xf32>
    %64 = vector.shape_cast %63 : vector<1x77x512xf32> to vector<77x512xf32>
    %65 = vector.shape_cast %1 : vector<77x512xf32> to vector<1x77x512xf32>
    tpu.vector_store %arg4[%c4, %c0_38, %c0_39], %65 {strides = array<i32>} : memref<16x77x512xf32, #tpu.memory_space<vmem>>, vector<1x77x512xf32>,
    %66 = arith.index_cast %62 : i32 to index
    %c0_40 = arith.constant 0 : index
    %c0_41 = arith.constant 0 : index
    %67 = vector.load %arg3[%66, %c0_40, %c0_41] : memref<10x4x512xf32, #tpu.memory_space<vmem>>, vector<1x4x512xf32>
    %68 = vector.shape_cast %67 : vector<1x4x512xf32> to vector<4x512xf32>
    %c4_42 = arith.constant 4 : index
    %c5_43 = arith.constant 5 : index
    %c0_44 = arith.constant 0 : index
    %69 = vector.load %arg4[%c4_42, %c5_43, %c0_44] : memref<16x77x512xf32, #tpu.memory_space<vmem>>, vector<1x4x512xf32>
    %70 = vector.shape_cast %69 : vector<1x4x512xf32> to vector<4x512xf32>
    %71 = vector.shape_cast %68 : vector<4x512xf32> to vector<1x4x512xf32>
    tpu.vector_store %arg4[%c4_42, %c5_43, %c0_44], %71 {strides = array<i32>} : memref<16x77x512xf32, #tpu.memory_space<vmem>>, vector<1x4x512xf32>,
    %c5_i32 = arith.constant 5 : i32
    %72 = arith.addi %0, %c5_i32 : i32
    %73 = arith.index_cast %72 : i32 to index
    %74 = memref.load %arg1[%73] : memref<32xi32, #tpu.memory_space<smem>>
    %c0_i32_45 = arith.constant 0 : i32
    %75 = arith.maxsi %74, %c0_i32_45 : i32
    %c9_i32_46 = arith.constant 9 : i32
    %76 = arith.minsi %75, %c9_i32_46 : i32
    %c5_47 = arith.constant 5 : index
    %c0_48 = arith.constant 0 : index
    %c0_49 = arith.constant 0 : index
    %77 = vector.load %arg4[%c5_47, %c0_48, %c0_49] : memref<16x77x512xf32, #tpu.memory_space<vmem>>, vector<1x77x512xf32>
    %78 = vector.shape_cast %77 : vector<1x77x512xf32> to vector<77x512xf32>
    %79 = vector.shape_cast %1 : vector<77x512xf32> to vector<1x77x512xf32>
    tpu.vector_store %arg4[%c5_47, %c0_48, %c0_49], %79 {strides = array<i32>} : memref<16x77x512xf32, #tpu.memory_space<vmem>>, vector<1x77x512xf32>,
    %80 = arith.index_cast %76 : i32 to index
    %c0_50 = arith.constant 0 : index
    %c0_51 = arith.constant 0 : index
    %81 = vector.load %arg3[%80, %c0_50, %c0_51] : memref<10x4x512xf32, #tpu.memory_space<vmem>>, vector<1x4x512xf32>
    %82 = vector.shape_cast %81 : vector<1x4x512xf32> to vector<4x512xf32>
    %c5_52 = arith.constant 5 : index
    %c5_53 = arith.constant 5 : index
    %c0_54 = arith.constant 0 : index
    %83 = vector.load %arg4[%c5_52, %c5_53, %c0_54] : memref<16x77x512xf32, #tpu.memory_space<vmem>>, vector<1x4x512xf32>
    %84 = vector.shape_cast %83 : vector<1x4x512xf32> to vector<4x512xf32>
    %85 = vector.shape_cast %82 : vector<4x512xf32> to vector<1x4x512xf32>
    tpu.vector_store %arg4[%c5_52, %c5_53, %c0_54], %85 {strides = array<i32>} : memref<16x77x512xf32, #tpu.memory_space<vmem>>, vector<1x4x512xf32>,
    %c6_i32 = arith.constant 6 : i32
    %86 = arith.addi %0, %c6_i32 : i32
    %87 = arith.index_cast %86 : i32 to index
    %88 = memref.load %arg1[%87] : memref<32xi32, #tpu.memory_space<smem>>
    %c0_i32_55 = arith.constant 0 : i32
    %89 = arith.maxsi %88, %c0_i32_55 : i32
    %c9_i32_56 = arith.constant 9 : i32
    %90 = arith.minsi %89, %c9_i32_56 : i32
    %c6 = arith.constant 6 : index
    %c0_57 = arith.constant 0 : index
    %c0_58 = arith.constant 0 : index
    %91 = vector.load %arg4[%c6, %c0_57, %c0_58] : memref<16x77x512xf32, #tpu.memory_space<vmem>>, vector<1x77x512xf32>
    %92 = vector.shape_cast %91 : vector<1x77x512xf32> to vector<77x512xf32>
    %93 = vector.shape_cast %1 : vector<77x512xf32> to vector<1x77x512xf32>
    tpu.vector_store %arg4[%c6, %c0_57, %c0_58], %93 {strides = array<i32>} : memref<16x77x512xf32, #tpu.memory_space<vmem>>, vector<1x77x512xf32>,
    %94 = arith.index_cast %90 : i32 to index
    %c0_59 = arith.constant 0 : index
    %c0_60 = arith.constant 0 : index
    %95 = vector.load %arg3[%94, %c0_59, %c0_60] : memref<10x4x512xf32, #tpu.memory_space<vmem>>, vector<1x4x512xf32>
    %96 = vector.shape_cast %95 : vector<1x4x512xf32> to vector<4x512xf32>
    %c6_61 = arith.constant 6 : index
    %c5_62 = arith.constant 5 : index
    %c0_63 = arith.constant 0 : index
    %97 = vector.load %arg4[%c6_61, %c5_62, %c0_63] : memref<16x77x512xf32, #tpu.memory_space<vmem>>, vector<1x4x512xf32>
    %98 = vector.shape_cast %97 : vector<1x4x512xf32> to vector<4x512xf32>
    %99 = vector.shape_cast %96 : vector<4x512xf32> to vector<1x4x512xf32>
    tpu.vector_store %arg4[%c6_61, %c5_62, %c0_63], %99 {strides = array<i32>} : memref<16x77x512xf32, #tpu.memory_space<vmem>>, vector<1x4x512xf32>,
    %c7_i32 = arith.constant 7 : i32
    %100 = arith.addi %0, %c7_i32 : i32
    %101 = arith.index_cast %100 : i32 to index
    %102 = memref.load %arg1[%101] : memref<32xi32, #tpu.memory_space<smem>>
    %c0_i32_64 = arith.constant 0 : i32
    %103 = arith.maxsi %102, %c0_i32_64 : i32
    %c9_i32_65 = arith.constant 9 : i32
    %104 = arith.minsi %103, %c9_i32_65 : i32
    %c7 = arith.constant 7 : index
    %c0_66 = arith.constant 0 : index
    %c0_67 = arith.constant 0 : index
    %105 = vector.load %arg4[%c7, %c0_66, %c0_67] : memref<16x77x512xf32, #tpu.memory_space<vmem>>, vector<1x77x512xf32>
    %106 = vector.shape_cast %105 : vector<1x77x512xf32> to vector<77x512xf32>
    %107 = vector.shape_cast %1 : vector<77x512xf32> to vector<1x77x512xf32>
    tpu.vector_store %arg4[%c7, %c0_66, %c0_67], %107 {strides = array<i32>} : memref<16x77x512xf32, #tpu.memory_space<vmem>>, vector<1x77x512xf32>,
    %108 = arith.index_cast %104 : i32 to index
    %c0_68 = arith.constant 0 : index
    %c0_69 = arith.constant 0 : index
    %109 = vector.load %arg3[%108, %c0_68, %c0_69] : memref<10x4x512xf32, #tpu.memory_space<vmem>>, vector<1x4x512xf32>
    %110 = vector.shape_cast %109 : vector<1x4x512xf32> to vector<4x512xf32>
    %c7_70 = arith.constant 7 : index
    %c5_71 = arith.constant 5 : index
    %c0_72 = arith.constant 0 : index
    %111 = vector.load %arg4[%c7_70, %c5_71, %c0_72] : memref<16x77x512xf32, #tpu.memory_space<vmem>>, vector<1x4x512xf32>
    %112 = vector.shape_cast %111 : vector<1x4x512xf32> to vector<4x512xf32>
    %113 = vector.shape_cast %110 : vector<4x512xf32> to vector<1x4x512xf32>
    tpu.vector_store %arg4[%c7_70, %c5_71, %c0_72], %113 {strides = array<i32>} : memref<16x77x512xf32, #tpu.memory_space<vmem>>, vector<1x4x512xf32>,
    %c8_i32 = arith.constant 8 : i32
    %114 = arith.addi %0, %c8_i32 : i32
    %115 = arith.index_cast %114 : i32 to index
    %116 = memref.load %arg1[%115] : memref<32xi32, #tpu.memory_space<smem>>
    %c0_i32_73 = arith.constant 0 : i32
    %117 = arith.maxsi %116, %c0_i32_73 : i32
    %c9_i32_74 = arith.constant 9 : i32
    %118 = arith.minsi %117, %c9_i32_74 : i32
    %c8 = arith.constant 8 : index
    %c0_75 = arith.constant 0 : index
    %c0_76 = arith.constant 0 : index
    %119 = vector.load %arg4[%c8, %c0_75, %c0_76] : memref<16x77x512xf32, #tpu.memory_space<vmem>>, vector<1x77x512xf32>
    %120 = vector.shape_cast %119 : vector<1x77x512xf32> to vector<77x512xf32>
    %121 = vector.shape_cast %1 : vector<77x512xf32> to vector<1x77x512xf32>
    tpu.vector_store %arg4[%c8, %c0_75, %c0_76], %121 {strides = array<i32>} : memref<16x77x512xf32, #tpu.memory_space<vmem>>, vector<1x77x512xf32>,
    %122 = arith.index_cast %118 : i32 to index
    %c0_77 = arith.constant 0 : index
    %c0_78 = arith.constant 0 : index
    %123 = vector.load %arg3[%122, %c0_77, %c0_78] : memref<10x4x512xf32, #tpu.memory_space<vmem>>, vector<1x4x512xf32>
    %124 = vector.shape_cast %123 : vector<1x4x512xf32> to vector<4x512xf32>
    %c8_79 = arith.constant 8 : index
    %c5_80 = arith.constant 5 : index
    %c0_81 = arith.constant 0 : index
    %125 = vector.load %arg4[%c8_79, %c5_80, %c0_81] : memref<16x77x512xf32, #tpu.memory_space<vmem>>, vector<1x4x512xf32>
    %126 = vector.shape_cast %125 : vector<1x4x512xf32> to vector<4x512xf32>
    %127 = vector.shape_cast %124 : vector<4x512xf32> to vector<1x4x512xf32>
    tpu.vector_store %arg4[%c8_79, %c5_80, %c0_81], %127 {strides = array<i32>} : memref<16x77x512xf32, #tpu.memory_space<vmem>>, vector<1x4x512xf32>,
    %c9_i32_82 = arith.constant 9 : i32
    %128 = arith.addi %0, %c9_i32_82 : i32
    %129 = arith.index_cast %128 : i32 to index
    %130 = memref.load %arg1[%129] : memref<32xi32, #tpu.memory_space<smem>>
    %c0_i32_83 = arith.constant 0 : i32
    %131 = arith.maxsi %130, %c0_i32_83 : i32
    %c9_i32_84 = arith.constant 9 : i32
    %132 = arith.minsi %131, %c9_i32_84 : i32
    %c9 = arith.constant 9 : index
    %c0_85 = arith.constant 0 : index
    %c0_86 = arith.constant 0 : index
    %133 = vector.load %arg4[%c9, %c0_85, %c0_86] : memref<16x77x512xf32, #tpu.memory_space<vmem>>, vector<1x77x512xf32>
    %134 = vector.shape_cast %133 : vector<1x77x512xf32> to vector<77x512xf32>
    %135 = vector.shape_cast %1 : vector<77x512xf32> to vector<1x77x512xf32>
    tpu.vector_store %arg4[%c9, %c0_85, %c0_86], %135 {strides = array<i32>} : memref<16x77x512xf32, #tpu.memory_space<vmem>>, vector<1x77x512xf32>,
    %136 = arith.index_cast %132 : i32 to index
    %c0_87 = arith.constant 0 : index
    %c0_88 = arith.constant 0 : index
    %137 = vector.load %arg3[%136, %c0_87, %c0_88] : memref<10x4x512xf32, #tpu.memory_space<vmem>>, vector<1x4x512xf32>
    %138 = vector.shape_cast %137 : vector<1x4x512xf32> to vector<4x512xf32>
    %c9_89 = arith.constant 9 : index
    %c5_90 = arith.constant 5 : index
    %c0_91 = arith.constant 0 : index
    %139 = vector.load %arg4[%c9_89, %c5_90, %c0_91] : memref<16x77x512xf32, #tpu.memory_space<vmem>>, vector<1x4x512xf32>
    %140 = vector.shape_cast %139 : vector<1x4x512xf32> to vector<4x512xf32>
    %141 = vector.shape_cast %138 : vector<4x512xf32> to vector<1x4x512xf32>
    tpu.vector_store %arg4[%c9_89, %c5_90, %c0_91], %141 {strides = array<i32>} : memref<16x77x512xf32, #tpu.memory_space<vmem>>, vector<1x4x512xf32>,
    %c10_i32 = arith.constant 10 : i32
    %142 = arith.addi %0, %c10_i32 : i32
    %143 = arith.index_cast %142 : i32 to index
    %144 = memref.load %arg1[%143] : memref<32xi32, #tpu.memory_space<smem>>
    %c0_i32_92 = arith.constant 0 : i32
    %145 = arith.maxsi %144, %c0_i32_92 : i32
    %c9_i32_93 = arith.constant 9 : i32
    %146 = arith.minsi %145, %c9_i32_93 : i32
    %c10 = arith.constant 10 : index
    %c0_94 = arith.constant 0 : index
    %c0_95 = arith.constant 0 : index
    %147 = vector.load %arg4[%c10, %c0_94, %c0_95] : memref<16x77x512xf32, #tpu.memory_space<vmem>>, vector<1x77x512xf32>
    %148 = vector.shape_cast %147 : vector<1x77x512xf32> to vector<77x512xf32>
    %149 = vector.shape_cast %1 : vector<77x512xf32> to vector<1x77x512xf32>
    tpu.vector_store %arg4[%c10, %c0_94, %c0_95], %149 {strides = array<i32>} : memref<16x77x512xf32, #tpu.memory_space<vmem>>, vector<1x77x512xf32>,
    %150 = arith.index_cast %146 : i32 to index
    %c0_96 = arith.constant 0 : index
    %c0_97 = arith.constant 0 : index
    %151 = vector.load %arg3[%150, %c0_96, %c0_97] : memref<10x4x512xf32, #tpu.memory_space<vmem>>, vector<1x4x512xf32>
    %152 = vector.shape_cast %151 : vector<1x4x512xf32> to vector<4x512xf32>
    %c10_98 = arith.constant 10 : index
    %c5_99 = arith.constant 5 : index
    %c0_100 = arith.constant 0 : index
    %153 = vector.load %arg4[%c10_98, %c5_99, %c0_100] : memref<16x77x512xf32, #tpu.memory_space<vmem>>, vector<1x4x512xf32>
    %154 = vector.shape_cast %153 : vector<1x4x512xf32> to vector<4x512xf32>
    %155 = vector.shape_cast %152 : vector<4x512xf32> to vector<1x4x512xf32>
    tpu.vector_store %arg4[%c10_98, %c5_99, %c0_100], %155 {strides = array<i32>} : memref<16x77x512xf32, #tpu.memory_space<vmem>>, vector<1x4x512xf32>,
    %c11_i32 = arith.constant 11 : i32
    %156 = arith.addi %0, %c11_i32 : i32
    %157 = arith.index_cast %156 : i32 to index
    %158 = memref.load %arg1[%157] : memref<32xi32, #tpu.memory_space<smem>>
    %c0_i32_101 = arith.constant 0 : i32
    %159 = arith.maxsi %158, %c0_i32_101 : i32
    %c9_i32_102 = arith.constant 9 : i32
    %160 = arith.minsi %159, %c9_i32_102 : i32
    %c11 = arith.constant 11 : index
    %c0_103 = arith.constant 0 : index
    %c0_104 = arith.constant 0 : index
    %161 = vector.load %arg4[%c11, %c0_103, %c0_104] : memref<16x77x512xf32, #tpu.memory_space<vmem>>, vector<1x77x512xf32>
    %162 = vector.shape_cast %161 : vector<1x77x512xf32> to vector<77x512xf32>
    %163 = vector.shape_cast %1 : vector<77x512xf32> to vector<1x77x512xf32>
    tpu.vector_store %arg4[%c11, %c0_103, %c0_104], %163 {strides = array<i32>} : memref<16x77x512xf32, #tpu.memory_space<vmem>>, vector<1x77x512xf32>,
    %164 = arith.index_cast %160 : i32 to index
    %c0_105 = arith.constant 0 : index
    %c0_106 = arith.constant 0 : index
    %165 = vector.load %arg3[%164, %c0_105, %c0_106] : memref<10x4x512xf32, #tpu.memory_space<vmem>>, vector<1x4x512xf32>
    %166 = vector.shape_cast %165 : vector<1x4x512xf32> to vector<4x512xf32>
    %c11_107 = arith.constant 11 : index
    %c5_108 = arith.constant 5 : index
    %c0_109 = arith.constant 0 : index
    %167 = vector.load %arg4[%c11_107, %c5_108, %c0_109] : memref<16x77x512xf32, #tpu.memory_space<vmem>>, vector<1x4x512xf32>
    %168 = vector.shape_cast %167 : vector<1x4x512xf32> to vector<4x512xf32>
    %169 = vector.shape_cast %166 : vector<4x512xf32> to vector<1x4x512xf32>
    tpu.vector_store %arg4[%c11_107, %c5_108, %c0_109], %169 {strides = array<i32>} : memref<16x77x512xf32, #tpu.memory_space<vmem>>, vector<1x4x512xf32>,
    %c12_i32 = arith.constant 12 : i32
    %170 = arith.addi %0, %c12_i32 : i32
    %171 = arith.index_cast %170 : i32 to index
    %172 = memref.load %arg1[%171] : memref<32xi32, #tpu.memory_space<smem>>
    %c0_i32_110 = arith.constant 0 : i32
    %173 = arith.maxsi %172, %c0_i32_110 : i32
    %c9_i32_111 = arith.constant 9 : i32
    %174 = arith.minsi %173, %c9_i32_111 : i32
    %c12 = arith.constant 12 : index
    %c0_112 = arith.constant 0 : index
    %c0_113 = arith.constant 0 : index
    %175 = vector.load %arg4[%c12, %c0_112, %c0_113] : memref<16x77x512xf32, #tpu.memory_space<vmem>>, vector<1x77x512xf32>
    %176 = vector.shape_cast %175 : vector<1x77x512xf32> to vector<77x512xf32>
    %177 = vector.shape_cast %1 : vector<77x512xf32> to vector<1x77x512xf32>
    tpu.vector_store %arg4[%c12, %c0_112, %c0_113], %177 {strides = array<i32>} : memref<16x77x512xf32, #tpu.memory_space<vmem>>, vector<1x77x512xf32>,
    %178 = arith.index_cast %174 : i32 to index
    %c0_114 = arith.constant 0 : index
    %c0_115 = arith.constant 0 : index
    %179 = vector.load %arg3[%178, %c0_114, %c0_115] : memref<10x4x512xf32, #tpu.memory_space<vmem>>, vector<1x4x512xf32>
    %180 = vector.shape_cast %179 : vector<1x4x512xf32> to vector<4x512xf32>
    %c12_116 = arith.constant 12 : index
    %c5_117 = arith.constant 5 : index
    %c0_118 = arith.constant 0 : index
    %181 = vector.load %arg4[%c12_116, %c5_117, %c0_118] : memref<16x77x512xf32, #tpu.memory_space<vmem>>, vector<1x4x512xf32>
    %182 = vector.shape_cast %181 : vector<1x4x512xf32> to vector<4x512xf32>
    %183 = vector.shape_cast %180 : vector<4x512xf32> to vector<1x4x512xf32>
    tpu.vector_store %arg4[%c12_116, %c5_117, %c0_118], %183 {strides = array<i32>} : memref<16x77x512xf32, #tpu.memory_space<vmem>>, vector<1x4x512xf32>,
    %c13_i32 = arith.constant 13 : i32
    %184 = arith.addi %0, %c13_i32 : i32
    %185 = arith.index_cast %184 : i32 to index
    %186 = memref.load %arg1[%185] : memref<32xi32, #tpu.memory_space<smem>>
    %c0_i32_119 = arith.constant 0 : i32
    %187 = arith.maxsi %186, %c0_i32_119 : i32
    %c9_i32_120 = arith.constant 9 : i32
    %188 = arith.minsi %187, %c9_i32_120 : i32
    %c13 = arith.constant 13 : index
    %c0_121 = arith.constant 0 : index
    %c0_122 = arith.constant 0 : index
    %189 = vector.load %arg4[%c13, %c0_121, %c0_122] : memref<16x77x512xf32, #tpu.memory_space<vmem>>, vector<1x77x512xf32>
    %190 = vector.shape_cast %189 : vector<1x77x512xf32> to vector<77x512xf32>
    %191 = vector.shape_cast %1 : vector<77x512xf32> to vector<1x77x512xf32>
    tpu.vector_store %arg4[%c13, %c0_121, %c0_122], %191 {strides = array<i32>} : memref<16x77x512xf32, #tpu.memory_space<vmem>>, vector<1x77x512xf32>,
    %192 = arith.index_cast %188 : i32 to index
    %c0_123 = arith.constant 0 : index
    %c0_124 = arith.constant 0 : index
    %193 = vector.load %arg3[%192, %c0_123, %c0_124] : memref<10x4x512xf32, #tpu.memory_space<vmem>>, vector<1x4x512xf32>
    %194 = vector.shape_cast %193 : vector<1x4x512xf32> to vector<4x512xf32>
    %c13_125 = arith.constant 13 : index
    %c5_126 = arith.constant 5 : index
    %c0_127 = arith.constant 0 : index
    %195 = vector.load %arg4[%c13_125, %c5_126, %c0_127] : memref<16x77x512xf32, #tpu.memory_space<vmem>>, vector<1x4x512xf32>
    %196 = vector.shape_cast %195 : vector<1x4x512xf32> to vector<4x512xf32>
    %197 = vector.shape_cast %194 : vector<4x512xf32> to vector<1x4x512xf32>
    tpu.vector_store %arg4[%c13_125, %c5_126, %c0_127], %197 {strides = array<i32>} : memref<16x77x512xf32, #tpu.memory_space<vmem>>, vector<1x4x512xf32>,
    %c14_i32 = arith.constant 14 : i32
    %198 = arith.addi %0, %c14_i32 : i32
    %199 = arith.index_cast %198 : i32 to index
    %200 = memref.load %arg1[%199] : memref<32xi32, #tpu.memory_space<smem>>
    %c0_i32_128 = arith.constant 0 : i32
    %201 = arith.maxsi %200, %c0_i32_128 : i32
    %c9_i32_129 = arith.constant 9 : i32
    %202 = arith.minsi %201, %c9_i32_129 : i32
    %c14 = arith.constant 14 : index
    %c0_130 = arith.constant 0 : index
    %c0_131 = arith.constant 0 : index
    %203 = vector.load %arg4[%c14, %c0_130, %c0_131] : memref<16x77x512xf32, #tpu.memory_space<vmem>>, vector<1x77x512xf32>
    %204 = vector.shape_cast %203 : vector<1x77x512xf32> to vector<77x512xf32>
    %205 = vector.shape_cast %1 : vector<77x512xf32> to vector<1x77x512xf32>
    tpu.vector_store %arg4[%c14, %c0_130, %c0_131], %205 {strides = array<i32>} : memref<16x77x512xf32, #tpu.memory_space<vmem>>, vector<1x77x512xf32>,
    %206 = arith.index_cast %202 : i32 to index
    %c0_132 = arith.constant 0 : index
    %c0_133 = arith.constant 0 : index
    %207 = vector.load %arg3[%206, %c0_132, %c0_133] : memref<10x4x512xf32, #tpu.memory_space<vmem>>, vector<1x4x512xf32>
    %208 = vector.shape_cast %207 : vector<1x4x512xf32> to vector<4x512xf32>
    %c14_134 = arith.constant 14 : index
    %c5_135 = arith.constant 5 : index
    %c0_136 = arith.constant 0 : index
    %209 = vector.load %arg4[%c14_134, %c5_135, %c0_136] : memref<16x77x512xf32, #tpu.memory_space<vmem>>, vector<1x4x512xf32>
    %210 = vector.shape_cast %209 : vector<1x4x512xf32> to vector<4x512xf32>
    %211 = vector.shape_cast %208 : vector<4x512xf32> to vector<1x4x512xf32>
    tpu.vector_store %arg4[%c14_134, %c5_135, %c0_136], %211 {strides = array<i32>} : memref<16x77x512xf32, #tpu.memory_space<vmem>>, vector<1x4x512xf32>,
    %c15_i32 = arith.constant 15 : i32
    %212 = arith.addi %0, %c15_i32 : i32
    %213 = arith.index_cast %212 : i32 to index
    %214 = memref.load %arg1[%213] : memref<32xi32, #tpu.memory_space<smem>>
    %c0_i32_137 = arith.constant 0 : i32
    %215 = arith.maxsi %214, %c0_i32_137 : i32
    %c9_i32_138 = arith.constant 9 : i32
    %216 = arith.minsi %215, %c9_i32_138 : i32
    %c15 = arith.constant 15 : index
    %c0_139 = arith.constant 0 : index
    %c0_140 = arith.constant 0 : index
    %217 = vector.load %arg4[%c15, %c0_139, %c0_140] : memref<16x77x512xf32, #tpu.memory_space<vmem>>, vector<1x77x512xf32>
    %218 = vector.shape_cast %217 : vector<1x77x512xf32> to vector<77x512xf32>
    %219 = vector.shape_cast %1 : vector<77x512xf32> to vector<1x77x512xf32>
    tpu.vector_store %arg4[%c15, %c0_139, %c0_140], %219 {strides = array<i32>} : memref<16x77x512xf32, #tpu.memory_space<vmem>>, vector<1x77x512xf32>,
    %220 = arith.index_cast %216 : i32 to index
    %c0_141 = arith.constant 0 : index
    %c0_142 = arith.constant 0 : index
    %221 = vector.load %arg3[%220, %c0_141, %c0_142] : memref<10x4x512xf32, #tpu.memory_space<vmem>>, vector<1x4x512xf32>
    %222 = vector.shape_cast %221 : vector<1x4x512xf32> to vector<4x512xf32>
    %c15_143 = arith.constant 15 : index
    %c5_144 = arith.constant 5 : index
    %c0_145 = arith.constant 0 : index
    %223 = vector.load %arg4[%c15_143, %c5_144, %c0_145] : memref<16x77x512xf32, #tpu.memory_space<vmem>>, vector<1x4x512xf32>
    %224 = vector.shape_cast %223 : vector<1x4x512xf32> to vector<4x512xf32>
    %225 = vector.shape_cast %222 : vector<4x512xf32> to vector<1x4x512xf32>
    tpu.vector_store %arg4[%c15_143, %c5_144, %c0_145], %225 {strides = array<i32>} : memref<16x77x512xf32, #tpu.memory_space<vmem>>, vector<1x4x512xf32>,
    return
  }
  func.func @transform_0(%arg0: i32, %arg1: memref<32xi32, #tpu.memory_space<smem>>) -> (i32, i32) {
    %c0_i32 = arith.constant 0 : i32
    %c0_i32_0 = arith.constant 0 : i32
    %c0_i32_1 = arith.constant 0 : i32
    return %c0_i32, %c0_i32_0 : i32, i32
  }
  func.func @transform_1(%arg0: i32, %arg1: memref<32xi32, #tpu.memory_space<smem>>) -> (i32, i32, i32) {
    %c0_i32 = arith.constant 0 : i32
    %c0_i32_0 = arith.constant 0 : i32
    %c0_i32_1 = arith.constant 0 : i32
    %c0_i32_2 = arith.constant 0 : i32
    return %c0_i32, %c0_i32_0, %c0_i32_1 : i32, i32, i32
  }
  func.func @transform_2(%arg0: i32, %arg1: memref<32xi32, #tpu.memory_space<smem>>) -> (i32, i32, i32) {
    %c0_i32 = arith.constant 0 : i32
    %c0_i32_0 = arith.constant 0 : i32
    %c0_i32_1 = arith.constant 0 : i32
    return %arg0, %c0_i32, %c0_i32_0 : i32, i32, i32
  }
}

</mosaic_0001>

<llo_original>
// kernel: prompt_learner_forward.1
$region0: #{prompt_learner_forward.1}
  #allocation0 [shape = 'u32[]', space=smem, size = 0x4, offset = 0x4, fixed_abs, tag = 'smem constant byte address 0x4 - core index']
  #allocation1 [shape = 'u32[144,128]{1,0:T(1,128)}', space=vmem, size = 0x12000, scoped, tag = 'internal scratch']
  #allocation2 [shape = 's32[1]{0}', space=sflag, size = 0x4, scoped, tag = 'scoped memory for prompt_learner_forward.1']
  #allocation3 [shape = 'u8[512]{0}', space=smem, size = 0x200, scoped, tag = 'prefetched SMEM operand 0']
  %s0 = inlined_call_operand.hbm [shape: s32[32], index: 0, kind: input, shape index: {}]
  %s1 = inlined_call_operand.vmem [shape: f32[77,512], index: 1, kind: input, shape index: {}]
  %s2 = inlined_call_operand.hbm [shape: f32[10,4,512], index: 2, kind: input, shape index: {}]
  %s3 = inlined_call_operand.vmem [shape: f32[32,77,512], index: 3, kind: output, shape index: {}]
  %s4 = sld [smem:[#allocation0]]
  $region45: #{prompt_learner_forward.1} parent=0
    _
  %s6 = ssub.s32 1, %s4
  %s7 = scalar_select 0, %s6, %s4
  %9 = dma.hbm_to_smem %s0, 16, [#allocation3], [#allocation2]
  %10 = dma.done [#allocation2], 16
  %11 = sfence
  $region1: #{prompt_learner_forward.1} parent=0
    #allocation4 [shape = 'u8[81920]{0}', space=vmem, size = 0x14000, scoped, tag = 'input window, operand 2, single buffered']
    #allocation5 [shape = 's32[2]{0}', space=sflag, size = 0x8, scoped, tag = 'scoped memory for prompt_learner_forward.1']
    %12 = vsyncpa [#allocation5], 0
    loop: start=0, step=1, limit=4
    $region2: #{prompt_learner_forward.1} parent=1 // loop_pre_header
      _
    $region3: #{prompt_learner_forward.1} parent=1 // loop_header
      %s14 = sphi 0, %s18
      %p15 = scmp.ge.s32.totalorder %s14, 4
      %s22 = sphi 0, %s22
      %s24 = sphi 0, %s22
      %s25 = sphi 0, %s24
      %s39 = sphi 0, %s25
      %s43 = sphi 0, %s43
      %s45 = sphi 0, %s43
      %s46 = sphi 0, %s45
      %s60 = sphi 0, %s46
      %s66 = sphi 0, %s68
      %s69 = sphi 0, %s66
      %s70 = sphi 0, %s69
      %s86 = sphi 0, %s70
    $region4: #{prompt_learner_forward.1} parent=1 // loop_header_branch
      %17 = sbr.rel (%p15) target = $region8
    $region5: #{prompt_learner_forward.1} parent=1 // loop_body
      %s19 = ssub.s32 %s14, 1
      %s20 = ssub.s32 %s14, 2
      %s21 = sadd.s32 %s14, 1
      %s23 = sadd.s32 %s22, 1
      %p26 = scmp.eq.s32.totalorder %s14, 1
      %p27 = scmp.ne.s32.totalorder %s22, %s24
      %p28 = scmp.eq.s32.totalorder %s14, 0
      %p29 = por %p27, %p28
      %p30 = scmp.ne.s32.totalorder %s22, %s24
      %p31 = scmp.eq.s32.totalorder %s19, 1
      %p32 = por %p30, %p31
      %p33 = scmp.ne.s32.totalorder %s24, %s25
      %p34 = scmp.eq.s32.totalorder %s19, 0
      %p35 = por %p33, %p34
      %p36 = scmp.ne.s32.totalorder %s24, %s25
      %p37 = scmp.eq.s32.totalorder %s20, 1
      %p38 = por %p36, %p37
      %p40 = scmp.ne.s32.totalorder %s25, %s39
      %p41 = scmp.eq.s32.totalorder %s20, 0
      %p42 = por %p40, %p41
      %s44 = sadd.s32 %s43, 1
      %p47 = scmp.eq.s32.totalorder %s14, 1
      %p48 = scmp.ne.s32.totalorder %s43, %s45
      %p49 = scmp.eq.s32.totalorder %s14, 0
      %p50 = por %p48, %p49
      %p51 = scmp.ne.s32.totalorder %s43, %s45
      %p52 = scmp.eq.s32.totalorder %s19, 1
      %p53 = por %p51, %p52
      %p54 = scmp.ne.s32.totalorder %s45, %s46
      %p55 = scmp.eq.s32.totalorder %s19, 0
      %p56 = por %p54, %p55
      %p57 = scmp.ne.s32.totalorder %s45, %s46
      %p58 = scmp.eq.s32.totalorder %s20, 1
      %p59 = por %p57, %p58
      %p61 = scmp.ne.s32.totalorder %s46, %s60
      %p62 = scmp.eq.s32.totalorder %s20, 0
      %p63 = por %p61, %p62
      %s64 = ssub.s32 %s14, %s21
      %p65 = scmp.eq.s32.totalorder %s64, 0
      %s67 = sadd.s32 %s66, 1
      %s68 = scalar_select %p65, %s66, %s67
      %p71 = pneg %p65
      %p72 = scmp.eq.s32.totalorder %s14, 1
      %p73 = por %p71, %p72
      %p74 = scmp.ne.s32.totalorder %s66, %s69
      %p75 = scmp.eq.s32.totalorder %s14, 0
      %p76 = por %p74, %p75
      %p77 = scmp.ne.s32.totalorder %s66, %s69
      %p78 = scmp.eq.s32.totalorder %s19, 1
      %p79 = por %p77, %p78
      %p80 = scmp.ne.s32.totalorder %s69, %s70
      %p81 = scmp.eq.s32.totalorder %s19, 0
      %p82 = por %p80, %p81
      %p83 = scmp.ne.s32.totalorder %s69, %s70
      %p84 = scmp.eq.s32.totalorder %s20, 1
      %p85 = por %p83, %p84
      %p87 = scmp.ne.s32.totalorder %s70, %s86
      %p88 = scmp.eq.s32.totalorder %s20, 0
      %p89 = por %p87, %p88
      %p90 = scmp.le.s32.totalorder 1, %s14
      %p91 = scmp.lt.s32.totalorder %s14, 3
      %p92 = pnand %p90, %p91
      %p93 = pneg %p92
      // Predicated region
      $region9: #{prompt_learner_forward.1} parent=5 // pred_check
        _
      $region10: #{prompt_learner_forward.1} parent=5 // pred_check_branch
        %95 = sbr.rel (%p92) target = $region12
      $region11: #{prompt_learner_forward.1} parent=5 // pred_region
        %s96 = ssub.s32 %s14, 1
        // Predicated region
        $region13: #{prompt_learner_forward.1} parent=11 // pred_check
          %p97 = pneg %p35
        $region14: #{prompt_learner_forward.1} parent=11 // pred_check_branch
          %99 = sbr.rel (%p97) target = $region16
        $region15: #{prompt_learner_forward.1} parent=11 // pred_region
          _
        $region16: #{prompt_learner_forward.1} parent=11 // pred_fallthru
          _
        // Predicated region
        $region17: #{prompt_learner_forward.1} parent=11 // pred_check
          %p100 = pneg %p56
        $region18: #{prompt_learner_forward.1} parent=11 // pred_check_branch
          %102 = sbr.rel (%p100) target = $region20
        $region19: #{prompt_learner_forward.1} parent=11 // pred_region
          %s104 = ssub.s32 2560, 2560
          %105 = vsyncadd [#allocation5], %s104
          %s106 = sshll.u32 [#allocation4], 4
          %s107 = int_to_ptr.vmem [resolvable:$true] %s106
          %112 = dma.hbm_to_vmem [thread:$0]  %s2, 2560, %s107, [#allocation5], 256, 256, 16
        $region20: #{prompt_learner_forward.1} parent=11 // pred_fallthru
          _
      $region12: #{prompt_learner_forward.1} parent=5 // pred_fallthru
        _
      %p113 = scmp.lt.s32.totalorder %s14, 2
      // Predicated region
      $region21: #{prompt_learner_forward.1} parent=5 // pred_check
        %p114 = pneg %p113
      $region22: #{prompt_learner_forward.1} parent=5 // pred_check_branch
        %116 = sbr.rel (%p114) target = $region24
      $region23: #{prompt_learner_forward.1} parent=5 // pred_region
        _
      $region24: #{prompt_learner_forward.1} parent=5 // pred_fallthru
        _
      %p117 = scmp.le.s32.totalorder 1, %s14
      %p118 = scmp.lt.s32.totalorder %s14, 3
      %p119 = pnand %p117, %p118
      %p120 = pneg %p119
      // Predicated region
      $region25: #{prompt_learner_forward.1} parent=5 // pred_check
        _
      $region26: #{prompt_learner_forward.1} parent=5 // pred_check_branch
        %122 = sbr.rel (%p119) target = $region28
      $region27: #{prompt_learner_forward.1} parent=5 // pred_region
        %s123 = ssub.s32 %s14, 1
        // Predicated region
        $region29: #{prompt_learner_forward.1} parent=27 // pred_check
          %p124 = pneg %p56
        $region30: #{prompt_learner_forward.1} parent=27 // pred_check_branch
          %126 = sbr.rel (%p124) target = $region32
        $region31: #{prompt_learner_forward.1} parent=27 // pred_region
          %127 = dma.done [#allocation5], 2560
        $region32: #{prompt_learner_forward.1} parent=27 // pred_fallthru
          _
        %p128 = pneg %p35
        %p129 = pneg %p32
        %p130 = pneg %p56
        %p131 = pneg %p53
        %p132 = pneg %p82
        %p133 = pneg %p79
        %s134 = smul.u32 16, %s19
        %p135 = scmp.lt.s32.totalorder %s134, 31
        %s136 = scalar_select %p135, %s134, 31
        %s137 = smul.addr %s136, 40
        %s138 = smul.addr %s137, 8
        %s139 = scalar_lea.vmem %s3, %s138
        %s140 = smul.u32 16, %s19
        %p141 = scmp.lt.s32.totalorder %s140, 31
        %s142 = scalar_select %p141, %s140, 31
        %s143 = smul.addr %s142, 40
        %s144 = smul.addr %s143, 8
        %s145 = scalar_lea.vmem %s3, %s144
        %s146 = smul.u32 16, %s19
        %s147 = smul.u32 %s19, 16
        %v148 = vld [vmem:[%s1] sm:$0xff]
        %v149 = vld [vmem:[%s1 + $0x8] sm:$0xff]
        %v150 = vld [vmem:[%s1 + $0x10] sm:$0xff]
        %v151 = vld [vmem:[%s1 + $0x18] sm:$0xff]
        %v152 = vld [vmem:[%s1 + $0x20] sm:$0xff]
        %v153 = vld [vmem:[%s1 + $0x28] sm:$0xff]
        %v154 = vld [vmem:[%s1 + $0x30] sm:$0xff]
        %v155 = vld [vmem:[%s1 + $0x38] sm:$0xff]
        %v156 = vld [vmem:[%s1 + $0x40] sm:$0xff]
        %v157 = vld [vmem:[%s1 + $0x48] sm:$0xff]
        %v158 = vld [vmem:[%s1 + $0x50] sm:$0xff]
        %v159 = vld [vmem:[%s1 + $0x58] sm:$0xff]
        %v160 = vld [vmem:[%s1 + $0x60] sm:$0xff]
        %v161 = vld [vmem:[%s1 + $0x68] sm:$0xff]
        %v162 = vld [vmem:[%s1 + $0x70] sm:$0xff]
        %v163 = vld [vmem:[%s1 + $0x78] sm:$0xff]
        %v164 = vld [vmem:[%s1 + $0x80] sm:$0xff]
        %v165 = vld [vmem:[%s1 + $0x88] sm:$0xff]
        %v166 = vld [vmem:[%s1 + $0x90] sm:$0xff]
        %v167 = vld [vmem:[%s1 + $0x98] sm:$0xff]
        %v168 = vld [vmem:[%s1 + $0xa0] sm:$0xff]
        %v169 = vld [vmem:[%s1 + $0xa8] sm:$0xff]
        %v170 = vld [vmem:[%s1 + $0xb0] sm:$0xff]
        %v171 = vld [vmem:[%s1 + $0xb8] sm:$0xff]
        %v172 = vld [vmem:[%s1 + $0xc0] sm:$0xff]
        %v173 = vld [vmem:[%s1 + $0xc8] sm:$0xff]
        %v174 = vld [vmem:[%s1 + $0xd0] sm:$0xff]
        %v175 = vld [vmem:[%s1 + $0xd8] sm:$0xff]
        %v176 = vld [vmem:[%s1 + $0xe0] sm:$0xff]
        %v177 = vld [vmem:[%s1 + $0xe8] sm:$0xff]
        %v178 = vld [vmem:[%s1 + $0xf0] sm:$0xff]
        %v179 = vld [vmem:[%s1 + $0xf8] sm:$0xff]
        %v180 = vld [vmem:[%s1 + $0x100] sm:$0xff]
        %v181 = vld [vmem:[%s1 + $0x108] sm:$0xff]
        %v182 = vld [vmem:[%s1 + $0x110] sm:$0xff]
        %v183 = vld [vmem:[%s1 + $0x118] sm:$0xff]
        %v184 = vld [vmem:[%s1 + $0x120] sm:$0x1f]
        %v185 = vld [vmem:[%s1 + $0x128] sm:$0x1f]
        %v186 = vld [vmem:[%s1 + $0x130] sm:$0x1f]
        %v187 = vld [vmem:[%s1 + $0x138] sm:$0x1f]
        %s188 = sld [smem:[#allocation3 + %s147]]
        %p189 = scmp.gt.s32.totalorder %s188, 0
        %s190 = scalar_select %p189, %s188, 0
        %p191 = scmp.lt.s32.totalorder %s190, 9
        %s192 = scalar_select %p191, %s190, 9
        %193 = vst [vmem:[%s145] sm:$0xff] %v148
        %194 = vst [vmem:[%s145 + $0x8] sm:$0xff] %v149
        %195 = vst [vmem:[%s145 + $0x10] sm:$0xff] %v150
        %196 = vst [vmem:[%s145 + $0x18] sm:$0xff] %v151
        %197 = vst [vmem:[%s145 + $0x20] sm:$0xff] %v152
        %198 = vst [vmem:[%s145 + $0x28] sm:$0xff] %v153
        %199 = vst [vmem:[%s145 + $0x30] sm:$0xff] %v154
        %200 = vst [vmem:[%s145 + $0x38] sm:$0xff] %v155
        %201 = vst [vmem:[%s145 + $0x40] sm:$0xff] %v156
        %202 = vst [vmem:[%s145 + $0x48] sm:$0xff] %v157
        %203 = vst [vmem:[%s145 + $0x50] sm:$0xff] %v158
        %204 = vst [vmem:[%s145 + $0x58] sm:$0xff] %v159
        %205 = vst [vmem:[%s145 + $0x60] sm:$0xff] %v160
        %206 = vst [vmem:[%s145 + $0x68] sm:$0xff] %v161
        %207 = vst [vmem:[%s145 + $0x70] sm:$0xff] %v162
        %208 = vst [vmem:[%s145 + $0x78] sm:$0xff] %v163
        %209 = vst [vmem:[%s145 + $0x80] sm:$0xff] %v164
        %210 = vst [vmem:[%s145 + $0x88] sm:$0xff] %v165
        %211 = vst [vmem:[%s145 + $0x90] sm:$0xff] %v166
        %212 = vst [vmem:[%s145 + $0x98] sm:$0xff] %v167
        %213 = vst [vmem:[%s145 + $0xa0] sm:$0xff] %v168
        %214 = vst [vmem:[%s145 + $0xa8] sm:$0xff] %v169
        %215 = vst [vmem:[%s145 + $0xb0] sm:$0xff] %v170
        %216 = vst [vmem:[%s145 + $0xb8] sm:$0xff] %v171
        %217 = vst [vmem:[%s145 + $0xc0] sm:$0xff] %v172
        %218 = vst [vmem:[%s145 + $0xc8] sm:$0xff] %v173
        %219 = vst [vmem:[%s145 + $0xd0] sm:$0xff] %v174
        %220 = vst [vmem:[%s145 + $0xd8] sm:$0xff] %v175
        %221 = vst [vmem:[%s145 + $0xe0] sm:$0xff] %v176
        %222 = vst [vmem:[%s145 + $0xe8] sm:$0xff] %v177
        %223 = vst [vmem:[%s145 + $0xf0] sm:$0xff] %v178
        %224 = vst [vmem:[%s145 + $0xf8] sm:$0xff] %v179
        %225 = vst [vmem:[%s145 + $0x100] sm:$0xff] %v180
        %226 = vst [vmem:[%s145 + $0x108] sm:$0xff] %v181
        %227 = vst [vmem:[%s145 + $0x110] sm:$0xff] %v182
        %228 = vst [vmem:[%s145 + $0x118] sm:$0xff] %v183
        %229 = vst [vmem:[%s145 + $0x120] sm:$0x1f] %v184
        %230 = vst [vmem:[%s145 + $0x128] sm:$0x1f] %v185
        %231 = vst [vmem:[%s145 + $0x130] sm:$0x1f] %v186
        %232 = vst [vmem:[%s145 + $0x138] sm:$0x1f] %v187
        %s233 = smul.u32 %s192, 4
        %s234 = smul.addr %s233, 4
        %s235 = scalar_lea.vmem [#allocation4], %s234
        %v236 = vld [vmem:[%s235] sm:$0xff]
        %v237 = vld [vmem:[%s235 + $0x8] sm:$0xff]
        %v240 = vcombine.high %v236, %v236
        %v241 = vcombine.high %v237, %v237
        %v242 = vrot.slane %v236, 3
        %v243 = vrot.slane %v240, 3
        %v244 = vrot.slane %v237, 3
        %v245 = vrot.slane %v241, 3
        %250 = vst [vmem:[%s145] sm:$0xe0] %v242
        %251 = vst [vmem:[%s145 + $0x8] sm:$0xe0] %v243
        %252 = vst [vmem:[%s145 + $0x10] sm:$0xe0] %v244
        %253 = vst [vmem:[%s145 + $0x18] sm:$0xe0] %v245
        %254 = vst [vmem:[%s145 + $0x20] sm:$0x1] %v242
        %255 = vst [vmem:[%s145 + $0x28] sm:$0x1] %v243
        %256 = vst [vmem:[%s145 + $0x30] sm:$0x1] %v244
        %257 = vst [vmem:[%s145 + $0x38] sm:$0x1] %v245
        %s258 = sadd.s32 %s147, 1
        %s259 = sld [smem:[#allocation3 + %s258]]
        %p260 = scmp.gt.s32.totalorder %s259, 0
        %s261 = scalar_select %p260, %s259, 0
        %p262 = scmp.lt.s32.totalorder %s261, 9
        %s263 = scalar_select %p262, %s261, 9
        %s264 = scalar_lea.vmem %s145, 320
        %265 = vst [vmem:[%s264] sm:$0xff] %v148
        %266 = vst [vmem:[%s264 + $0x8] sm:$0xff] %v149
        %267 = vst [vmem:[%s264 + $0x10] sm:$0xff] %v150
        %268 = vst [vmem:[%s264 + $0x18] sm:$0xff] %v151
        %269 = vst [vmem:[%s264 + $0x20] sm:$0xff] %v152
        %270 = vst [vmem:[%s264 + $0x28] sm:$0xff] %v153
        %271 = vst [vmem:[%s264 + $0x30] sm:$0xff] %v154
        %272 = vst [vmem:[%s264 + $0x38] sm:$0xff] %v155
        %273 = vst [vmem:[%s264 + $0x40] sm:$0xff] %v156
        %274 = vst [vmem:[%s264 + $0x48] sm:$0xff] %v157
        %275 = vst [vmem:[%s264 + $0x50] sm:$0xff] %v158
        %276 = vst [vmem:[%s264 + $0x58] sm:$0xff] %v159
        %277 = vst [vmem:[%s264 + $0x60] sm:$0xff] %v160
        %278 = vst [vmem:[%s264 + $0x68] sm:$0xff] %v161
        %279 = vst [vmem:[%s264 + $0x70] sm:$0xff] %v162
        %280 = vst [vmem:[%s264 + $0x78] sm:$0xff] %v163
        %281 = vst [vmem:[%s264 + $0x80] sm:$0xff] %v164
        %282 = vst [vmem:[%s264 + $0x88] sm:$0xff] %v165
        %283 = vst [vmem:[%s264 + $0x90] sm:$0xff] %v166
        %284 = vst [vmem:[%s264 + $0x98] sm:$0xff] %v167
        %285 = vst [vmem:[%s264 + $0xa0] sm:$0xff] %v168
        %286 = vst [vmem:[%s264 + $0xa8] sm:$0xff] %v169
        %287 = vst [vmem:[%s264 + $0xb0] sm:$0xff] %v170
        %288 = vst [vmem:[%s264 + $0xb8] sm:$0xff] %v171
        %289 = vst [vmem:[%s264 + $0xc0] sm:$0xff] %v172
        %290 = vst [vmem:[%s264 + $0xc8] sm:$0xff] %v173
        %291 = vst [vmem:[%s264 + $0xd0] sm:$0xff] %v174
        %292 = vst [vmem:[%s264 + $0xd8] sm:$0xff] %v175
        %293 = vst [vmem:[%s264 + $0xe0] sm:$0xff] %v176
        %294 = vst [vmem:[%s264 + $0xe8] sm:$0xff] %v177
        %295 = vst [vmem:[%s264 + $0xf0] sm:$0xff] %v178
        %296 = vst [vmem:[%s264 + $0xf8] sm:$0xff] %v179
        %297 = vst [vmem:[%s264 + $0x100] sm:$0xff] %v180
        %298 = vst [vmem:[%s264 + $0x108] sm:$0xff] %v181
        %299 = vst [vmem:[%s264 + $0x110] sm:$0xff] %v182
        %300 = vst [vmem:[%s264 + $0x118] sm:$0xff] %v183
        %301 = vst [vmem:[%s264 + $0x120] sm:$0x1f] %v184
        %302 = vst [vmem:[%s264 + $0x128] sm:$0x1f] %v185
        %303 = vst [vmem:[%s264 + $0x130] sm:$0x1f] %v186
        %304 = vst [vmem:[%s264 + $0x138] sm:$0x1f] %v187
        %s305 = smul.u32 %s263, 4
        %s306 = smul.addr %s305, 4
        %s307 = scalar_lea.vmem [#allocation4], %s306
        %v308 = vld [vmem:[%s307] sm:$0xff]
        %v309 = vld [vmem:[%s307 + $0x8] sm:$0xff]
        %v312 = vcombine.high %v308, %v308
        %v313 = vcombine.high %v309, %v309
        %v314 = vrot.slane %v308, 3
        %v315 = vrot.slane %v312, 3
        %v316 = vrot.slane %v309, 3
        %v317 = vrot.slane %v313, 3
        %322 = vst [vmem:[%s264] sm:$0xe0] %v314
        %323 = vst [vmem:[%s264 + $0x8] sm:$0xe0] %v315
        %324 = vst [vmem:[%s264 + $0x10] sm:$0xe0] %v316
        %325 = vst [vmem:[%s264 + $0x18] sm:$0xe0] %v317
        %326 = vst [vmem:[%s264 + $0x20] sm:$0x1] %v314
        %327 = vst [vmem:[%s264 + $0x28] sm:$0x1] %v315
        %328 = vst [vmem:[%s264 + $0x30] sm:$0x1] %v316
        %329 = vst [vmem:[%s264 + $0x38] sm:$0x1] %v317
        %s330 = sadd.s32 %s147, 2
        %s331 = sld [smem:[#allocation3 + %s330]]
        %p332 = scmp.gt.s32.totalorder %s331, 0
        %s333 = scalar_select %p332, %s331, 0
        %p334 = scmp.lt.s32.totalorder %s333, 9
        %s335 = scalar_select %p334, %s333, 9
        %s336 = scalar_lea.vmem %s145, 640
        %337 = vst [vmem:[%s336] sm:$0xff] %v148
        %338 = vst [vmem:[%s336 + $0x8] sm:$0xff] %v149
        %339 = vst [vmem:[%s336 + $0x10] sm:$0xff] %v150
        %340 = vst [vmem:[%s336 + $0x18] sm:$0xff] %v151
        %341 = vst [vmem:[%s336 + $0x20] sm:$0xff] %v152
        %342 = vst [vmem:[%s336 + $0x28] sm:$0xff] %v153
        %343 = vst [vmem:[%s336 + $0x30] sm:$0xff] %v154
        %344 = vst [vmem:[%s336 + $0x38] sm:$0xff] %v155
        %345 = vst [vmem:[%s336 + $0x40] sm:$0xff] %v156
        %346 = vst [vmem:[%s336 + $0x48] sm:$0xff] %v157
        %347 = vst [vmem:[%s336 + $0x50] sm:$0xff] %v158
        %348 = vst [vmem:[%s336 + $0x58] sm:$0xff] %v159
        %349 = vst [vmem:[%s336 + $0x60] sm:$0xff] %v160
        %350 = vst [vmem:[%s336 + $0x68] sm:$0xff] %v161
        %351 = vst [vmem:[%s336 + $0x70] sm:$0xff] %v162
        %352 = vst [vmem:[%s336 + $0x78] sm:$0xff] %v163
        %353 = vst [vmem:[%s336 + $0x80] sm:$0xff] %v164
        %354 = vst [vmem:[%s336 + $0x88] sm:$0xff] %v165
        %355 = vst [vmem:[%s336 + $0x90] sm:$0xff] %v166
        %356 = vst [vmem:[%s336 + $0x98] sm:$0xff] %v167
        %357 = vst [vmem:[%s336 + $0xa0] sm:$0xff] %v168
        %358 = vst [vmem:[%s336 + $0xa8] sm:$0xff] %v169
        %359 = vst [vmem:[%s336 + $0xb0] sm:$0xff] %v170
        %360 = vst [vmem:[%s336 + $0xb8] sm:$0xff] %v171
        %361 = vst [vmem:[%s336 + $0xc0] sm:$0xff] %v172
        %362 = vst [vmem:[%s336 + $0xc8] sm:$0xff] %v173
        %363 = vst [vmem:[%s336 + $0xd0] sm:$0xff] %v174
        %364 = vst [vmem:[%s336 + $0xd8] sm:$0xff] %v175
        %365 = vst [vmem:[%s336 + $0xe0] sm:$0xff] %v176
        %366 = vst [vmem:[%s336 + $0xe8] sm:$0xff] %v177
        %367 = vst [vmem:[%s336 + $0xf0] sm:$0xff] %v178
        %368 = vst [vmem:[%s336 + $0xf8] sm:$0xff] %v179
        %369 = vst [vmem:[%s336 + $0x100] sm:$0xff] %v180
        %370 = vst [vmem:[%s336 + $0x108] sm:$0xff] %v181
        %371 = vst [vmem:[%s336 + $0x110] sm:$0xff] %v182
        %372 = vst [vmem:[%s336 + $0x118] sm:$0xff] %v183
        %373 = vst [vmem:[%s336 + $0x120] sm:$0x1f] %v184
        %374 = vst [vmem:[%s336 + $0x128] sm:$0x1f] %v185
        %375 = vst [vmem:[%s336 + $0x130] sm:$0x1f] %v186
        %376 = vst [vmem:[%s336 + $0x138] sm:$0x1f] %v187
        %s377 = smul.u32 %s335, 4
        %s378 = smul.addr %s377, 4
        %s379 = scalar_lea.vmem [#allocation4], %s378
        %v380 = vld [vmem:[%s379] sm:$0xff]
        %v381 = vld [vmem:[%s379 + $0x8] sm:$0xff]
        %v384 = vcombine.high %v380, %v380
        %v385 = vcombine.high %v381, %v381
        %v386 = vrot.slane %v380, 3
        %v387 = vrot.slane %v384, 3
        %v388 = vrot.slane %v381, 3
        %v389 = vrot.slane %v385, 3
        %394 = vst [vmem:[%s336] sm:$0xe0] %v386
        %395 = vst [vmem:[%s336 + $0x8] sm:$0xe0] %v387
        %396 = vst [vmem:[%s336 + $0x10] sm:$0xe0] %v388
        %397 = vst [vmem:[%s336 + $0x18] sm:$0xe0] %v389
        %398 = vst [vmem:[%s336 + $0x20] sm:$0x1] %v386
        %399 = vst [vmem:[%s336 + $0x28] sm:$0x1] %v387
        %400 = vst [vmem:[%s336 + $0x30] sm:$0x1] %v388
        %401 = vst [vmem:[%s336 + $0x38] sm:$0x1] %v389
        %s402 = sadd.s32 %s147, 3
        %s403 = sld [smem:[#allocation3 + %s402]]
        %p404 = scmp.gt.s32.totalorder %s403, 0
        %s405 = scalar_select %p404, %s403, 0
        %p406 = scmp.lt.s32.totalorder %s405, 9
        %s407 = scalar_select %p406, %s405, 9
        %s408 = scalar_lea.vmem %s145, 960
        %409 = vst [vmem:[%s408] sm:$0xff] %v148
        %410 = vst [vmem:[%s408 + $0x8] sm:$0xff] %v149
        %411 = vst [vmem:[%s408 + $0x10] sm:$0xff] %v150
        %412 = vst [vmem:[%s408 + $0x18] sm:$0xff] %v151
        %413 = vst [vmem:[%s408 + $0x20] sm:$0xff] %v152
        %414 = vst [vmem:[%s408 + $0x28] sm:$0xff] %v153
        %415 = vst [vmem:[%s408 + $0x30] sm:$0xff] %v154
        %416 = vst [vmem:[%s408 + $0x38] sm:$0xff] %v155
        %417 = vst [vmem:[%s408 + $0x40] sm:$0xff] %v156
        %418 = vst [vmem:[%s408 + $0x48] sm:$0xff] %v157
        %419 = vst [vmem:[%s408 + $0x50] sm:$0xff] %v158
        %420 = vst [vmem:[%s408 + $0x58] sm:$0xff] %v159
        %421 = vst [vmem:[%s408 + $0x60] sm:$0xff] %v160
        %422 = vst [vmem:[%s408 + $0x68] sm:$0xff] %v161
        %423 = vst [vmem:[%s408 + $0x70] sm:$0xff] %v162
        %424 = vst [vmem:[%s408 + $0x78] sm:$0xff] %v163
        %425 = vst [vmem:[%s408 + $0x80] sm:$0xff] %v164
        %426 = vst [vmem:[%s408 + $0x88] sm:$0xff] %v165
        %427 = vst [vmem:[%s408 + $0x90] sm:$0xff] %v166
        %428 = vst [vmem:[%s408 + $0x98] sm:$0xff] %v167
        %429 = vst [vmem:[%s408 + $0xa0] sm:$0xff] %v168
        %430 = vst [vmem:[%s408 + $0xa8] sm:$0xff] %v169
        %431 = vst [vmem:[%s408 + $0xb0] sm:$0xff] %v170
        %432 = vst [vmem:[%s408 + $0xb8] sm:$0xff] %v171
        %433 = vst [vmem:[%s408 + $0xc0] sm:$0xff] %v172
        %434 = vst [vmem:[%s408 + $0xc8] sm:$0xff] %v173
        %435 = vst [vmem:[%s408 + $0xd0] sm:$0xff] %v174
        %436 = vst [vmem:[%s408 + $0xd8] sm:$0xff] %v175
        %437 = vst [vmem:[%s408 + $0xe0] sm:$0xff] %v176
        %438 = vst [vmem:[%s408 + $0xe8] sm:$0xff] %v177
        %439 = vst [vmem:[%s408 + $0xf0] sm:$0xff] %v178
        %440 = vst [vmem:[%s408 + $0xf8] sm:$0xff] %v179
        %441 = vst [vmem:[%s408 + $0x100] sm:$0xff] %v180
        %442 = vst [vmem:[%s408 + $0x108] sm:$0xff] %v181
        %443 = vst [vmem:[%s408 + $0x110] sm:$0xff] %v182
        %444 = vst [vmem:[%s408 + $0x118] sm:$0xff] %v183
        %445 = vst [vmem:[%s408 + $0x120] sm:$0x1f] %v184
        %446 = vst [vmem:[%s408 + $0x128] sm:$0x1f] %v185
        %447 = vst [vmem:[%s408 + $0x130] sm:$0x1f] %v186
        %448 = vst [vmem:[%s408 + $0x138] sm:$0x1f] %v187
        %s449 = smul.u32 %s407, 4
        %s450 = smul.addr %s449, 4
        %s451 = scalar_lea.vmem [#allocation4], %s450
        %v452 = vld [vmem:[%s451] sm:$0xff]
        %v453 = vld [vmem:[%s451 + $0x8] sm:$0xff]
        %v456 = vcombine.high %v452, %v452
        %v457 = vcombine.high %v453, %v453
        %v458 = vrot.slane %v452, 3
        %v459 = vrot.slane %v456, 3
        %v460 = vrot.slane %v453, 3
        %v461 = vrot.slane %v457, 3
        %466 = vst [vmem:[%s408] sm:$0xe0] %v458
        %467 = vst [vmem:[%s408 + $0x8] sm:$0xe0] %v459
        %468 = vst [vmem:[%s408 + $0x10] sm:$0xe0] %v460
        %469 = vst [vmem:[%s408 + $0x18] sm:$0xe0] %v461
        %470 = vst [vmem:[%s408 + $0x20] sm:$0x1] %v458
        %471 = vst [vmem:[%s408 + $0x28] sm:$0x1] %v459
        %472 = vst [vmem:[%s408 + $0x30] sm:$0x1] %v460
        %473 = vst [vmem:[%s408 + $0x38] sm:$0x1] %v461
        %s474 = sadd.s32 %s147, 4
        %s475 = sld [smem:[#allocation3 + %s474]]
        %p476 = scmp.gt.s32.totalorder %s475, 0
        %s477 = scalar_select %p476, %s475, 0
        %p478 = scmp.lt.s32.totalorder %s477, 9
        %s479 = scalar_select %p478, %s477, 9
        %s480 = scalar_lea.vmem %s145, 1280
        %481 = vst [vmem:[%s480] sm:$0xff] %v148
        %482 = vst [vmem:[%s480 + $0x8] sm:$0xff] %v149
        %483 = vst [vmem:[%s480 + $0x10] sm:$0xff] %v150
        %484 = vst [vmem:[%s480 + $0x18] sm:$0xff] %v151
        %485 = vst [vmem:[%s480 + $0x20] sm:$0xff] %v152
        %486 = vst [vmem:[%s480 + $0x28] sm:$0xff] %v153
        %487 = vst [vmem:[%s480 + $0x30] sm:$0xff] %v154
        %488 = vst [vmem:[%s480 + $0x38] sm:$0xff] %v155
        %489 = vst [vmem:[%s480 + $0x40] sm:$0xff] %v156
        %490 = vst [vmem:[%s480 + $0x48] sm:$0xff] %v157
        %491 = vst [vmem:[%s480 + $0x50] sm:$0xff] %v158
        %492 = vst [vmem:[%s480 + $0x58] sm:$0xff] %v159
        %493 = vst [vmem:[%s480 + $0x60] sm:$0xff] %v160
        %494 = vst [vmem:[%s480 + $0x68] sm:$0xff] %v161
        %495 = vst [vmem:[%s480 + $0x70] sm:$0xff] %v162
        %496 = vst [vmem:[%s480 + $0x78] sm:$0xff] %v163
        %497 = vst [vmem:[%s480 + $0x80] sm:$0xff] %v164
        %498 = vst [vmem:[%s480 + $0x88] sm:$0xff] %v165
        %499 = vst [vmem:[%s480 + $0x90] sm:$0xff] %v166
        %500 = vst [vmem:[%s480 + $0x98] sm:$0xff] %v167
        %501 = vst [vmem:[%s480 + $0xa0] sm:$0xff] %v168
        %502 = vst [vmem:[%s480 + $0xa8] sm:$0xff] %v169
        %503 = vst [vmem:[%s480 + $0xb0] sm:$0xff] %v170
        %504 = vst [vmem:[%s480 + $0xb8] sm:$0xff] %v171
        %505 = vst [vmem:[%s480 + $0xc0] sm:$0xff] %v172
        %506 = vst [vmem:[%s480 + $0xc8] sm:$0xff] %v173
        %507 = vst [vmem:[%s480 + $0xd0] sm:$0xff] %v174
        %508 = vst [vmem:[%s480 + $0xd8] sm:$0xff] %v175
        %509 = vst [vmem:[%s480 + $0xe0] sm:$0xff] %v176
        %510 = vst [vmem:[%s480 + $0xe8] sm:$0xff] %v177
        %511 = vst [vmem:[%s480 + $0xf0] sm:$0xff] %v178
        %512 = vst [vmem:[%s480 + $0xf8] sm:$0xff] %v179
        %513 = vst [vmem:[%s480 + $0x100] sm:$0xff] %v180
        %514 = vst [vmem:[%s480 + $0x108] sm:$0xff] %v181
        %515 = vst [vmem:[%s480 + $0x110] sm:$0xff] %v182
        %516 = vst [vmem:[%s480 + $0x118] sm:$0xff] %v183
        %517 = vst [vmem:[%s480 + $0x120] sm:$0x1f] %v184
        %518 = vst [vmem:[%s480 + $0x128] sm:$0x1f] %v185
        %519 = vst [vmem:[%s480 + $0x130] sm:$0x1f] %v186
        %520 = vst [vmem:[%s480 + $0x138] sm:$0x1f] %v187
        %s521 = smul.u32 %s479, 4
        %s522 = smul.addr %s521, 4
        %s523 = scalar_lea.vmem [#allocation4], %s522
        %v524 = vld [vmem:[%s523] sm:$0xff]
        %v525 = vld [vmem:[%s523 + $0x8] sm:$0xff]
        %v528 = vcombine.high %v524, %v524
        %v529 = vcombine.high %v525, %v525
        %v530 = vrot.slane %v524, 3
        %v531 = vrot.slane %v528, 3
        %v532 = vrot.slane %v525, 3
        %v533 = vrot.slane %v529, 3
        %538 = vst [vmem:[%s480] sm:$0xe0] %v530
        %539 = vst [vmem:[%s480 + $0x8] sm:$0xe0] %v531
        %540 = vst [vmem:[%s480 + $0x10] sm:$0xe0] %v532
        %541 = vst [vmem:[%s480 + $0x18] sm:$0xe0] %v533
        %542 = vst [vmem:[%s480 + $0x20] sm:$0x1] %v530
        %543 = vst [vmem:[%s480 + $0x28] sm:$0x1] %v531
        %544 = vst [vmem:[%s480 + $0x30] sm:$0x1] %v532
        %545 = vst [vmem:[%s480 + $0x38] sm:$0x1] %v533
        %s546 = sadd.s32 %s147, 5
        %s547 = sld [smem:[#allocation3 + %s546]]
        %p548 = scmp.gt.s32.totalorder %s547, 0
        %s549 = scalar_select %p548, %s547, 0
        %p550 = scmp.lt.s32.totalorder %s549, 9
        %s551 = scalar_select %p550, %s549, 9
        %s552 = scalar_lea.vmem %s145, 1600
        %553 = vst [vmem:[%s552] sm:$0xff] %v148
        %554 = vst [vmem:[%s552 + $0x8] sm:$0xff] %v149
        %555 = vst [vmem:[%s552 + $0x10] sm:$0xff] %v150
        %556 = vst [vmem:[%s552 + $0x18] sm:$0xff] %v151
        %557 = vst [vmem:[%s552 + $0x20] sm:$0xff] %v152
        %558 = vst [vmem:[%s552 + $0x28] sm:$0xff] %v153
        %559 = vst [vmem:[%s552 + $0x30] sm:$0xff] %v154
        %560 = vst [vmem:[%s552 + $0x38] sm:$0xff] %v155
        %561 = vst [vmem:[%s552 + $0x40] sm:$0xff] %v156
        %562 = vst [vmem:[%s552 + $0x48] sm:$0xff] %v157
        %563 = vst [vmem:[%s552 + $0x50] sm:$0xff] %v158
        %564 = vst [vmem:[%s552 + $0x58] sm:$0xff] %v159
        %565 = vst [vmem:[%s552 + $0x60] sm:$0xff] %v160
        %566 = vst [vmem:[%s552 + $0x68] sm:$0xff] %v161
        %567 = vst [vmem:[%s552 + $0x70] sm:$0xff] %v162
        %568 = vst [vmem:[%s552 + $0x78] sm:$0xff] %v163
        %569 = vst [vmem:[%s552 + $0x80] sm:$0xff] %v164
        %570 = vst [vmem:[%s552 + $0x88] sm:$0xff] %v165
        %571 = vst [vmem:[%s552 + $0x90] sm:$0xff] %v166
        %572 = vst [vmem:[%s552 + $0x98] sm:$0xff] %v167
        %573 = vst [vmem:[%s552 + $0xa0] sm:$0xff] %v168
        %574 = vst [vmem:[%s552 + $0xa8] sm:$0xff] %v169
        %575 = vst [vmem:[%s552 + $0xb0] sm:$0xff] %v170
        %576 = vst [vmem:[%s552 + $0xb8] sm:$0xff] %v171
        %577 = vst [vmem:[%s552 + $0xc0] sm:$0xff] %v172
        %578 = vst [vmem:[%s552 + $0xc8] sm:$0xff] %v173
        %579 = vst [vmem:[%s552 + $0xd0] sm:$0xff] %v174
        %580 = vst [vmem:[%s552 + $0xd8] sm:$0xff] %v175
        %581 = vst [vmem:[%s552 + $0xe0] sm:$0xff] %v176
        %582 = vst [vmem:[%s552 + $0xe8] sm:$0xff] %v177
        %583 = vst [vmem:[%s552 + $0xf0] sm:$0xff] %v178
        %584 = vst [vmem:[%s552 + $0xf8] sm:$0xff] %v179
        %585 = vst [vmem:[%s552 + $0x100] sm:$0xff] %v180
        %586 = vst [vmem:[%s552 + $0x108] sm:$0xff] %v181
        %587 = vst [vmem:[%s552 + $0x110] sm:$0xff] %v182
        %588 = vst [vmem:[%s552 + $0x118] sm:$0xff] %v183
        %589 = vst [vmem:[%s552 + $0x120] sm:$0x1f] %v184
        %590 = vst [vmem:[%s552 + $0x128] sm:$0x1f] %v185
        %591 = vst [vmem:[%s552 + $0x130] sm:$0x1f] %v186
        %592 = vst [vmem:[%s552 + $0x138] sm:$0x1f] %v187
        %s593 = smul.u32 %s551, 4
        %s594 = smul.addr %s593, 4
        %s595 = scalar_lea.vmem [#allocation4], %s594
        %v596 = vld [vmem:[%s595] sm:$0xff]
        %v597 = vld [vmem:[%s595 + $0x8] sm:$0xff]
        %v600 = vcombine.high %v596, %v596
        %v601 = vcombine.high %v597, %v597
        %v602 = vrot.slane %v596, 3
        %v603 = vrot.slane %v600, 3
        %v604 = vrot.slane %v597, 3
        %v605 = vrot.slane %v601, 3
        %610 = vst [vmem:[%s552] sm:$0xe0] %v602
        %611 = vst [vmem:[%s552 + $0x8] sm:$0xe0] %v603
        %612 = vst [vmem:[%s552 + $0x10] sm:$0xe0] %v604
        %613 = vst [vmem:[%s552 + $0x18] sm:$0xe0] %v605
        %614 = vst [vmem:[%s552 + $0x20] sm:$0x1] %v602
        %615 = vst [vmem:[%s552 + $0x28] sm:$0x1] %v603
        %616 = vst [vmem:[%s552 + $0x30] sm:$0x1] %v604
        %617 = vst [vmem:[%s552 + $0x38] sm:$0x1] %v605
        %s618 = sadd.s32 %s147, 6
        %s619 = sld [smem:[#allocation3 + %s618]]
        %p620 = scmp.gt.s32.totalorder %s619, 0
        %s621 = scalar_select %p620, %s619, 0
        %p622 = scmp.lt.s32.totalorder %s621, 9
        %s623 = scalar_select %p622, %s621, 9
        %s624 = scalar_lea.vmem %s145, 1920
        %625 = vst [vmem:[%s624] sm:$0xff] %v148
        %626 = vst [vmem:[%s624 + $0x8] sm:$0xff] %v149
        %627 = vst [vmem:[%s624 + $0x10] sm:$0xff] %v150
        %628 = vst [vmem:[%s624 + $0x18] sm:$0xff] %v151
        %629 = vst [vmem:[%s624 + $0x20] sm:$0xff] %v152
        %630 = vst [vmem:[%s624 + $0x28] sm:$0xff] %v153
        %631 = vst [vmem:[%s624 + $0x30] sm:$0xff] %v154
        %632 = vst [vmem:[%s624 + $0x38] sm:$0xff] %v155
        %633 = vst [vmem:[%s624 + $0x40] sm:$0xff] %v156
        %634 = vst [vmem:[%s624 + $0x48] sm:$0xff] %v157
        %635 = vst [vmem:[%s624 + $0x50] sm:$0xff] %v158
        %636 = vst [vmem:[%s624 + $0x58] sm:$0xff] %v159
        %637 = vst [vmem:[%s624 + $0x60] sm:$0xff] %v160
        %638 = vst [vmem:[%s624 + $0x68] sm:$0xff] %v161
        %639 = vst [vmem:[%s624 + $0x70] sm:$0xff] %v162
        %640 = vst [vmem:[%s624 + $0x78] sm:$0xff] %v163
        %641 = vst [vmem:[%s624 + $0x80] sm:$0xff] %v164
        %642 = vst [vmem:[%s624 + $0x88] sm:$0xff] %v165
        %643 = vst [vmem:[%s624 + $0x90] sm:$0xff] %v166
        %644 = vst [vmem:[%s624 + $0x98] sm:$0xff] %v167
        %645 = vst [vmem:[%s624 + $0xa0] sm:$0xff] %v168
        %646 = vst [vmem:[%s624 + $0xa8] sm:$0xff] %v169
        %647 = vst [vmem:[%s624 + $0xb0] sm:$0xff] %v170
        %648 = vst [vmem:[%s624 + $0xb8] sm:$0xff] %v171
        %649 = vst [vmem:[%s624 + $0xc0] sm:$0xff] %v172
        %650 = vst [vmem:[%s624 + $0xc8] sm:$0xff] %v173
        %651 = vst [vmem:[%s624 + $0xd0] sm:$0xff] %v174
        %652 = vst [vmem:[%s624 + $0xd8] sm:$0xff] %v175
        %653 = vst [vmem:[%s624 + $0xe0] sm:$0xff] %v176
        %654 = vst [vmem:[%s624 + $0xe8] sm:$0xff] %v177
        %655 = vst [vmem:[%s624 + $0xf0] sm:$0xff] %v178
        %656 = vst [vmem:[%s624 + $0xf8] sm:$0xff] %v179
        %657 = vst [vmem:[%s624 + $0x100] sm:$0xff] %v180
        %658 = vst [vmem:[%s624 + $0x108] sm:$0xff] %v181
        %659 = vst [vmem:[%s624 + $0x110] sm:$0xff] %v182
        %660 = vst [vmem:[%s624 + $0x118] sm:$0xff] %v183
        %661 = vst [vmem:[%s624 + $0x120] sm:$0x1f] %v184
        %662 = vst [vmem:[%s624 + $0x128] sm:$0x1f] %v185
        %663 = vst [vmem:[%s624 + $0x130] sm:$0x1f] %v186
        %664 = vst [vmem:[%s624 + $0x138] sm:$0x1f] %v187
        %s665 = smul.u32 %s623, 4
        %s666 = smul.addr %s665, 4
        %s667 = scalar_lea.vmem [#allocation4], %s666
        %v668 = vld [vmem:[%s667] sm:$0xff]
        %v669 = vld [vmem:[%s667 + $0x8] sm:$0xff]
        %v672 = vcombine.high %v668, %v668
        %v673 = vcombine.high %v669, %v669
        %v674 = vrot.slane %v668, 3
        %v675 = vrot.slane %v672, 3
        %v676 = vrot.slane %v669, 3
        %v677 = vrot.slane %v673, 3
        %682 = vst [vmem:[%s624] sm:$0xe0] %v674
        %683 = vst [vmem:[%s624 + $0x8] sm:$0xe0] %v675
        %684 = vst [vmem:[%s624 + $0x10] sm:$0xe0] %v676
        %685 = vst [vmem:[%s624 + $0x18] sm:$0xe0] %v677
        %686 = vst [vmem:[%s624 + $0x20] sm:$0x1] %v674
        %687 = vst [vmem:[%s624 + $0x28] sm:$0x1] %v675
        %688 = vst [vmem:[%s624 + $0x30] sm:$0x1] %v676
        %689 = vst [vmem:[%s624 + $0x38] sm:$0x1] %v677
        %s690 = sadd.s32 %s147, 7
        %s691 = sld [smem:[#allocation3 + %s690]]
        %p692 = scmp.gt.s32.totalorder %s691, 0
        %s693 = scalar_select %p692, %s691, 0
        %p694 = scmp.lt.s32.totalorder %s693, 9
        %s695 = scalar_select %p694, %s693, 9
        %s696 = scalar_lea.vmem %s145, 2240
        %697 = vst [vmem:[%s696] sm:$0xff] %v148
        %698 = vst [vmem:[%s696 + $0x8] sm:$0xff] %v149
        %699 = vst [vmem:[%s696 + $0x10] sm:$0xff] %v150
        %700 = vst [vmem:[%s696 + $0x18] sm:$0xff] %v151
        %701 = vst [vmem:[%s696 + $0x20] sm:$0xff] %v152
        %702 = vst [vmem:[%s696 + $0x28] sm:$0xff] %v153
        %703 = vst [vmem:[%s696 + $0x30] sm:$0xff] %v154
        %704 = vst [vmem:[%s696 + $0x38] sm:$0xff] %v155
        %705 = vst [vmem:[%s696 + $0x40] sm:$0xff] %v156
        %706 = vst [vmem:[%s696 + $0x48] sm:$0xff] %v157
        %707 = vst [vmem:[%s696 + $0x50] sm:$0xff] %v158
        %708 = vst [vmem:[%s696 + $0x58] sm:$0xff] %v159
        %709 = vst [vmem:[%s696 + $0x60] sm:$0xff] %v160
        %710 = vst [vmem:[%s696 + $0x68] sm:$0xff] %v161
        %711 = vst [vmem:[%s696 + $0x70] sm:$0xff] %v162
        %712 = vst [vmem:[%s696 + $0x78] sm:$0xff] %v163
        %713 = vst [vmem:[%s696 + $0x80] sm:$0xff] %v164
        %714 = vst [vmem:[%s696 + $0x88] sm:$0xff] %v165
        %715 = vst [vmem:[%s696 + $0x90] sm:$0xff] %v166
        %716 = vst [vmem:[%s696 + $0x98] sm:$0xff] %v167
        %717 = vst [vmem:[%s696 + $0xa0] sm:$0xff] %v168
        %718 = vst [vmem:[%s696 + $0xa8] sm:$0xff] %v169
        %719 = vst [vmem:[%s696 + $0xb0] sm:$0xff] %v170
        %720 = vst [vmem:[%s696 + $0xb8] sm:$0xff] %v171
        %721 = vst [vmem:[%s696 + $0xc0] sm:$0xff] %v172
        %722 = vst [vmem:[%s696 + $0xc8] sm:$0xff] %v173
        %723 = vst [vmem:[%s696 + $0xd0] sm:$0xff] %v174
        %724 = vst [vmem:[%s696 + $0xd8] sm:$0xff] %v175
        %725 = vst [vmem:[%s696 + $0xe0] sm:$0xff] %v176
        %726 = vst [vmem:[%s696 + $0xe8] sm:$0xff] %v177
        %727 = vst [vmem:[%s696 + $0xf0] sm:$0xff] %v178
        %728 = vst [vmem:[%s696 + $0xf8] sm:$0xff] %v179
        %729 = vst [vmem:[%s696 + $0x100] sm:$0xff] %v180
        %730 = vst [vmem:[%s696 + $0x108] sm:$0xff] %v181
        %731 = vst [vmem:[%s696 + $0x110] sm:$0xff] %v182
        %732 = vst [vmem:[%s696 + $0x118] sm:$0xff] %v183
        %733 = vst [vmem:[%s696 + $0x120] sm:$0x1f] %v184
        %734 = vst [vmem:[%s696 + $0x128] sm:$0x1f] %v185
        %735 = vst [vmem:[%s696 + $0x130] sm:$0x1f] %v186
        %736 = vst [vmem:[%s696 + $0x138] sm:$0x1f] %v187
        %s737 = smul.u32 %s695, 4
        %s738 = smul.addr %s737, 4
        %s739 = scalar_lea.vmem [#allocation4], %s738
        %v740 = vld [vmem:[%s739] sm:$0xff]
        %v741 = vld [vmem:[%s739 + $0x8] sm:$0xff]
        %v744 = vcombine.high %v740, %v740
        %v745 = vcombine.high %v741, %v741
        %v746 = vrot.slane %v740, 3
        %v747 = vrot.slane %v744, 3
        %v748 = vrot.slane %v741, 3
        %v749 = vrot.slane %v745, 3
        %754 = vst [vmem:[%s696] sm:$0xe0] %v746
        %755 = vst [vmem:[%s696 + $0x8] sm:$0xe0] %v747
        %756 = vst [vmem:[%s696 + $0x10] sm:$0xe0] %v748
        %757 = vst [vmem:[%s696 + $0x18] sm:$0xe0] %v749
        %758 = vst [vmem:[%s696 + $0x20] sm:$0x1] %v746
        %759 = vst [vmem:[%s696 + $0x28] sm:$0x1] %v747
        %760 = vst [vmem:[%s696 + $0x30] sm:$0x1] %v748
        %761 = vst [vmem:[%s696 + $0x38] sm:$0x1] %v749
        %s762 = sadd.s32 %s147, 8
        %s763 = sld [smem:[#allocation3 + %s762]]
        %p764 = scmp.gt.s32.totalorder %s763, 0
        %s765 = scalar_select %p764, %s763, 0
        %p766 = scmp.lt.s32.totalorder %s765, 9
        %s767 = scalar_select %p766, %s765, 9
        %s768 = scalar_lea.vmem %s145, 2560
        %769 = vst [vmem:[%s768] sm:$0xff] %v148
        %770 = vst [vmem:[%s768 + $0x8] sm:$0xff] %v149
        %771 = vst [vmem:[%s768 + $0x10] sm:$0xff] %v150
        %772 = vst [vmem:[%s768 + $0x18] sm:$0xff] %v151
        %773 = vst [vmem:[%s768 + $0x20] sm:$0xff] %v152
        %774 = vst [vmem:[%s768 + $0x28] sm:$0xff] %v153
        %775 = vst [vmem:[%s768 + $0x30] sm:$0xff] %v154
        %776 = vst [vmem:[%s768 + $0x38] sm:$0xff] %v155
        %777 = vst [vmem:[%s768 + $0x40] sm:$0xff] %v156
        %778 = vst [vmem:[%s768 + $0x48] sm:$0xff] %v157
        %779 = vst [vmem:[%s768 + $0x50] sm:$0xff] %v158
        %780 = vst [vmem:[%s768 + $0x58] sm:$0xff] %v159
        %781 = vst [vmem:[%s768 + $0x60] sm:$0xff] %v160
        %782 = vst [vmem:[%s768 + $0x68] sm:$0xff] %v161
        %783 = vst [vmem:[%s768 + $0x70] sm:$0xff] %v162
        %784 = vst [vmem:[%s768 + $0x78] sm:$0xff] %v163
        %785 = vst [vmem:[%s768 + $0x80] sm:$0xff] %v164
        %786 = vst [vmem:[%s768 + $0x88] sm:$0xff] %v165
        %787 = vst [vmem:[%s768 + $0x90] sm:$0xff] %v166
        %788 = vst [vmem:[%s768 + $0x98] sm:$0xff] %v167
        %789 = vst [vmem:[%s768 + $0xa0] sm:$0xff] %v168
        %790 = vst [vmem:[%s768 + $0xa8] sm:$0xff] %v169
        %791 = vst [vmem:[%s768 + $0xb0] sm:$0xff] %v170
        %792 = vst [vmem:[%s768 + $0xb8] sm:$0xff] %v171
        %793 = vst [vmem:[%s768 + $0xc0] sm:$0xff] %v172
        %794 = vst [vmem:[%s768 + $0xc8] sm:$0xff] %v173
        %795 = vst [vmem:[%s768 + $0xd0] sm:$0xff] %v174
        %796 = vst [vmem:[%s768 + $0xd8] sm:$0xff] %v175
        %797 = vst [vmem:[%s768 + $0xe0] sm:$0xff] %v176
        %798 = vst [vmem:[%s768 + $0xe8] sm:$0xff] %v177
        %799 = vst [vmem:[%s768 + $0xf0] sm:$0xff] %v178
        %800 = vst [vmem:[%s768 + $0xf8] sm:$0xff] %v179
        %801 = vst [vmem:[%s768 + $0x100] sm:$0xff] %v180
        %802 = vst [vmem:[%s768 + $0x108] sm:$0xff] %v181
        %803 = vst [vmem:[%s768 + $0x110] sm:$0xff] %v182
        %804 = vst [vmem:[%s768 + $0x118] sm:$0xff] %v183
        %805 = vst [vmem:[%s768 + $0x120] sm:$0x1f] %v184
        %806 = vst [vmem:[%s768 + $0x128] sm:$0x1f] %v185
        %807 = vst [vmem:[%s768 + $0x130] sm:$0x1f] %v186
        %808 = vst [vmem:[%s768 + $0x138] sm:$0x1f] %v187
        %s809 = smul.u32 %s767, 4
        %s810 = smul.addr %s809, 4
        %s811 = scalar_lea.vmem [#allocation4], %s810
        %v812 = vld [vmem:[%s811] sm:$0xff]
        %v813 = vld [vmem:[%s811 + $0x8] sm:$0xff]
        %v816 = vcombine.high %v812, %v812
        %v817 = vcombine.high %v813, %v813
        %v818 = vrot.slane %v812, 3
        %v819 = vrot.slane %v816, 3
        %v820 = vrot.slane %v813, 3
        %v821 = vrot.slane %v817, 3
        %826 = vst [vmem:[%s768] sm:$0xe0] %v818
        %827 = vst [vmem:[%s768 + $0x8] sm:$0xe0] %v819
        %828 = vst [vmem:[%s768 + $0x10] sm:$0xe0] %v820
        %829 = vst [vmem:[%s768 + $0x18] sm:$0xe0] %v821
        %830 = vst [vmem:[%s768 + $0x20] sm:$0x1] %v818
        %831 = vst [vmem:[%s768 + $0x28] sm:$0x1] %v819
        %832 = vst [vmem:[%s768 + $0x30] sm:$0x1] %v820
        %833 = vst [vmem:[%s768 + $0x38] sm:$0x1] %v821
        %s834 = sadd.s32 %s147, 9
        %s835 = sld [smem:[#allocation3 + %s834]]
        %p836 = scmp.gt.s32.totalorder %s835, 0
        %s837 = scalar_select %p836, %s835, 0
        %p838 = scmp.lt.s32.totalorder %s837, 9
        %s839 = scalar_select %p838, %s837, 9
        %s840 = scalar_lea.vmem %s145, 2880
        %841 = vst [vmem:[%s840] sm:$0xff] %v148
        %842 = vst [vmem:[%s840 + $0x8] sm:$0xff] %v149
        %843 = vst [vmem:[%s840 + $0x10] sm:$0xff] %v150
        %844 = vst [vmem:[%s840 + $0x18] sm:$0xff] %v151
        %845 = vst [vmem:[%s840 + $0x20] sm:$0xff] %v152
        %846 = vst [vmem:[%s840 + $0x28] sm:$0xff] %v153
        %847 = vst [vmem:[%s840 + $0x30] sm:$0xff] %v154
        %848 = vst [vmem:[%s840 + $0x38] sm:$0xff] %v155
        %849 = vst [vmem:[%s840 + $0x40] sm:$0xff] %v156
        %850 = vst [vmem:[%s840 + $0x48] sm:$0xff] %v157
        %851 = vst [vmem:[%s840 + $0x50] sm:$0xff] %v158
        %852 = vst [vmem:[%s840 + $0x58] sm:$0xff] %v159
        %853 = vst [vmem:[%s840 + $0x60] sm:$0xff] %v160
        %854 = vst [vmem:[%s840 + $0x68] sm:$0xff] %v161
        %855 = vst [vmem:[%s840 + $0x70] sm:$0xff] %v162
        %856 = vst [vmem:[%s840 + $0x78] sm:$0xff] %v163
        %857 = vst [vmem:[%s840 + $0x80] sm:$0xff] %v164
        %858 = vst [vmem:[%s840 + $0x88] sm:$0xff] %v165
        %859 = vst [vmem:[%s840 + $0x90] sm:$0xff] %v166
        %860 = vst [vmem:[%s840 + $0x98] sm:$0xff] %v167
        %861 = vst [vmem:[%s840 + $0xa0] sm:$0xff] %v168
        %862 = vst [vmem:[%s840 + $0xa8] sm:$0xff] %v169
        %863 = vst [vmem:[%s840 + $0xb0] sm:$0xff] %v170
        %864 = vst [vmem:[%s840 + $0xb8] sm:$0xff] %v171
        %865 = vst [vmem:[%s840 + $0xc0] sm:$0xff] %v172
        %866 = vst [vmem:[%s840 + $0xc8] sm:$0xff] %v173
        %867 = vst [vmem:[%s840 + $0xd0] sm:$0xff] %v174
        %868 = vst [vmem:[%s840 + $0xd8] sm:$0xff] %v175
        %869 = vst [vmem:[%s840 + $0xe0] sm:$0xff] %v176
        %870 = vst [vmem:[%s840 + $0xe8] sm:$0xff] %v177
        %871 = vst [vmem:[%s840 + $0xf0] sm:$0xff] %v178
        %872 = vst [vmem:[%s840 + $0xf8] sm:$0xff] %v179
        %873 = vst [vmem:[%s840 + $0x100] sm:$0xff] %v180
        %874 = vst [vmem:[%s840 + $0x108] sm:$0xff] %v181
        %875 = vst [vmem:[%s840 + $0x110] sm:$0xff] %v182
        %876 = vst [vmem:[%s840 + $0x118] sm:$0xff] %v183
        %877 = vst [vmem:[%s840 + $0x120] sm:$0x1f] %v184
        %878 = vst [vmem:[%s840 + $0x128] sm:$0x1f] %v185
        %879 = vst [vmem:[%s840 + $0x130] sm:$0x1f] %v186
        %880 = vst [vmem:[%s840 + $0x138] sm:$0x1f] %v187
        %s881 = smul.u32 %s839, 4
        %s882 = smul.addr %s881, 4
        %s883 = scalar_lea.vmem [#allocation4], %s882
        %v884 = vld [vmem:[%s883] sm:$0xff]
        %v885 = vld [vmem:[%s883 + $0x8] sm:$0xff]
        %v888 = vcombine.high %v884, %v884
        %v889 = vcombine.high %v885, %v885
        %v890 = vrot.slane %v884, 3
        %v891 = vrot.slane %v888, 3
        %v892 = vrot.slane %v885, 3
        %v893 = vrot.slane %v889, 3
        %898 = vst [vmem:[%s840] sm:$0xe0] %v890
        %899 = vst [vmem:[%s840 + $0x8] sm:$0xe0] %v891
        %900 = vst [vmem:[%s840 + $0x10] sm:$0xe0] %v892
        %901 = vst [vmem:[%s840 + $0x18] sm:$0xe0] %v893
        %902 = vst [vmem:[%s840 + $0x20] sm:$0x1] %v890
        %903 = vst [vmem:[%s840 + $0x28] sm:$0x1] %v891
        %904 = vst [vmem:[%s840 + $0x30] sm:$0x1] %v892
        %905 = vst [vmem:[%s840 + $0x38] sm:$0x1] %v893
        %s906 = sadd.s32 %s147, 10
        %s907 = sld [smem:[#allocation3 + %s906]]
        %p908 = scmp.gt.s32.totalorder %s907, 0
        %s909 = scalar_select %p908, %s907, 0
        %p910 = scmp.lt.s32.totalorder %s909, 9
        %s911 = scalar_select %p910, %s909, 9
        %s912 = scalar_lea.vmem %s145, 3200
        %913 = vst [vmem:[%s912] sm:$0xff] %v148
        %914 = vst [vmem:[%s912 + $0x8] sm:$0xff] %v149
        %915 = vst [vmem:[%s912 + $0x10] sm:$0xff] %v150
        %916 = vst [vmem:[%s912 + $0x18] sm:$0xff] %v151
        %917 = vst [vmem:[%s912 + $0x20] sm:$0xff] %v152
        %918 = vst [vmem:[%s912 + $0x28] sm:$0xff] %v153
        %919 = vst [vmem:[%s912 + $0x30] sm:$0xff] %v154
        %920 = vst [vmem:[%s912 + $0x38] sm:$0xff] %v155
        %921 = vst [vmem:[%s912 + $0x40] sm:$0xff] %v156
        %922 = vst [vmem:[%s912 + $0x48] sm:$0xff] %v157
        %923 = vst [vmem:[%s912 + $0x50] sm:$0xff] %v158
        %924 = vst [vmem:[%s912 + $0x58] sm:$0xff] %v159
        %925 = vst [vmem:[%s912 + $0x60] sm:$0xff] %v160
        %926 = vst [vmem:[%s912 + $0x68] sm:$0xff] %v161
        %927 = vst [vmem:[%s912 + $0x70] sm:$0xff] %v162
        %928 = vst [vmem:[%s912 + $0x78] sm:$0xff] %v163
        %929 = vst [vmem:[%s912 + $0x80] sm:$0xff] %v164
        %930 = vst [vmem:[%s912 + $0x88] sm:$0xff] %v165
        %931 = vst [vmem:[%s912 + $0x90] sm:$0xff] %v166
        %932 = vst [vmem:[%s912 + $0x98] sm:$0xff] %v167
        %933 = vst [vmem:[%s912 + $0xa0] sm:$0xff] %v168
        %934 = vst [vmem:[%s912 + $0xa8] sm:$0xff] %v169
        %935 = vst [vmem:[%s912 + $0xb0] sm:$0xff] %v170
        %936 = vst [vmem:[%s912 + $0xb8] sm:$0xff] %v171
        %937 = vst [vmem:[%s912 + $0xc0] sm:$0xff] %v172
        %938 = vst [vmem:[%s912 + $0xc8] sm:$0xff] %v173
        %939 = vst [vmem:[%s912 + $0xd0] sm:$0xff] %v174
        %940 = vst [vmem:[%s912 + $0xd8] sm:$0xff] %v175
        %941 = vst [vmem:[%s912 + $0xe0] sm:$0xff] %v176
        %942 = vst [vmem:[%s912 + $0xe8] sm:$0xff] %v177
        %943 = vst [vmem:[%s912 + $0xf0] sm:$0xff] %v178
        %944 = vst [vmem:[%s912 + $0xf8] sm:$0xff] %v179
        %945 = vst [vmem:[%s912 + $0x100] sm:$0xff] %v180
        %946 = vst [vmem:[%s912 + $0x108] sm:$0xff] %v181
        %947 = vst [vmem:[%s912 + $0x110] sm:$0xff] %v182
        %948 = vst [vmem:[%s912 + $0x118] sm:$0xff] %v183
        %949 = vst [vmem:[%s912 + $0x120] sm:$0x1f] %v184
        %950 = vst [vmem:[%s912 + $0x128] sm:$0x1f] %v185
        %951 = vst [vmem:[%s912 + $0x130] sm:$0x1f] %v186
        %952 = vst [vmem:[%s912 + $0x138] sm:$0x1f] %v187
        %s953 = smul.u32 %s911, 4
        %s954 = smul.addr %s953, 4
        %s955 = scalar_lea.vmem [#allocation4], %s954
        %v956 = vld [vmem:[%s955] sm:$0xff]
        %v957 = vld [vmem:[%s955 + $0x8] sm:$0xff]
        %v960 = vcombine.high %v956, %v956
        %v961 = vcombine.high %v957, %v957
        %v962 = vrot.slane %v956, 3
        %v963 = vrot.slane %v960, 3
        %v964 = vrot.slane %v957, 3
        %v965 = vrot.slane %v961, 3
        %970 = vst [vmem:[%s912] sm:$0xe0] %v962
        %971 = vst [vmem:[%s912 + $0x8] sm:$0xe0] %v963
        %972 = vst [vmem:[%s912 + $0x10] sm:$0xe0] %v964
        %973 = vst [vmem:[%s912 + $0x18] sm:$0xe0] %v965
        %974 = vst [vmem:[%s912 + $0x20] sm:$0x1] %v962
        %975 = vst [vmem:[%s912 + $0x28] sm:$0x1] %v963
        %976 = vst [vmem:[%s912 + $0x30] sm:$0x1] %v964
        %977 = vst [vmem:[%s912 + $0x38] sm:$0x1] %v965
        %s978 = sadd.s32 %s147, 11
        %s979 = sld [smem:[#allocation3 + %s978]]
        %p980 = scmp.gt.s32.totalorder %s979, 0
        %s981 = scalar_select %p980, %s979, 0
        %p982 = scmp.lt.s32.totalorder %s981, 9
        %s983 = scalar_select %p982, %s981, 9
        %s984 = scalar_lea.vmem %s145, 3520
        %985 = vst [vmem:[%s984] sm:$0xff] %v148
        %986 = vst [vmem:[%s984 + $0x8] sm:$0xff] %v149
        %987 = vst [vmem:[%s984 + $0x10] sm:$0xff] %v150
        %988 = vst [vmem:[%s984 + $0x18] sm:$0xff] %v151
        %989 = vst [vmem:[%s984 + $0x20] sm:$0xff] %v152
        %990 = vst [vmem:[%s984 + $0x28] sm:$0xff] %v153
        %991 = vst [vmem:[%s984 + $0x30] sm:$0xff] %v154
        %992 = vst [vmem:[%s984 + $0x38] sm:$0xff] %v155
        %993 = vst [vmem:[%s984 + $0x40] sm:$0xff] %v156
        %994 = vst [vmem:[%s984 + $0x48] sm:$0xff] %v157
        %995 = vst [vmem:[%s984 + $0x50] sm:$0xff] %v158
        %996 = vst [vmem:[%s984 + $0x58] sm:$0xff] %v159
        %997 = vst [vmem:[%s984 + $0x60] sm:$0xff] %v160
        %998 = vst [vmem:[%s984 + $0x68] sm:$0xff] %v161
        %999 = vst [vmem:[%s984 + $0x70] sm:$0xff] %v162
        %1000 = vst [vmem:[%s984 + $0x78] sm:$0xff] %v163
        %1001 = vst [vmem:[%s984 + $0x80] sm:$0xff] %v164
        %1002 = vst [vmem:[%s984 + $0x88] sm:$0xff] %v165
        %1003 = vst [vmem:[%s984 + $0x90] sm:$0xff] %v166
        %1004 = vst [vmem:[%s984 + $0x98] sm:$0xff] %v167
        %1005 = vst [vmem:[%s984 + $0xa0] sm:$0xff] %v168
        %1006 = vst [vmem:[%s984 + $0xa8] sm:$0xff] %v169
        %1007 = vst [vmem:[%s984 + $0xb0] sm:$0xff] %v170
        %1008 = vst [vmem:[%s984 + $0xb8] sm:$0xff] %v171
        %1009 = vst [vmem:[%s984 + $0xc0] sm:$0xff] %v172
        %1010 = vst [vmem:[%s984 + $0xc8] sm:$0xff] %v173
        %1011 = vst [vmem:[%s984 + $0xd0] sm:$0xff] %v174
        %1012 = vst [vmem:[%s984 + $0xd8] sm:$0xff] %v175
        %1013 = vst [vmem:[%s984 + $0xe0] sm:$0xff] %v176
        %1014 = vst [vmem:[%s984 + $0xe8] sm:$0xff] %v177
        %1015 = vst [vmem:[%s984 + $0xf0] sm:$0xff] %v178
        %1016 = vst [vmem:[%s984 + $0xf8] sm:$0xff] %v179
        %1017 = vst [vmem:[%s984 + $0x100] sm:$0xff] %v180
        %1018 = vst [vmem:[%s984 + $0x108] sm:$0xff] %v181
        %1019 = vst [vmem:[%s984 + $0x110] sm:$0xff] %v182
        %1020 = vst [vmem:[%s984 + $0x118] sm:$0xff] %v183
        %1021 = vst [vmem:[%s984 + $0x120] sm:$0x1f] %v184
        %1022 = vst [vmem:[%s984 + $0x128] sm:$0x1f] %v185
        %1023 = vst [vmem:[%s984 + $0x130] sm:$0x1f] %v186
        %1024 = vst [vmem:[%s984 + $0x138] sm:$0x1f] %v187
        %s1025 = smul.u32 %s983, 4
        %s1026 = smul.addr %s1025, 4
        %s1027 = scalar_lea.vmem [#allocation4], %s1026
        %v1028 = vld [vmem:[%s1027] sm:$0xff]
        %v1029 = vld [vmem:[%s1027 + $0x8] sm:$0xff]
        %v1032 = vcombine.high %v1028, %v1028
        %v1033 = vcombine.high %v1029, %v1029
        %v1034 = vrot.slane %v1028, 3
        %v1035 = vrot.slane %v1032, 3
        %v1036 = vrot.slane %v1029, 3
        %v1037 = vrot.slane %v1033, 3
        %1042 = vst [vmem:[%s984] sm:$0xe0] %v1034
        %1043 = vst [vmem:[%s984 + $0x8] sm:$0xe0] %v1035
        %1044 = vst [vmem:[%s984 + $0x10] sm:$0xe0] %v1036
        %1045 = vst [vmem:[%s984 + $0x18] sm:$0xe0] %v1037
        %1046 = vst [vmem:[%s984 + $0x20] sm:$0x1] %v1034
        %1047 = vst [vmem:[%s984 + $0x28] sm:$0x1] %v1035
        %1048 = vst [vmem:[%s984 + $0x30] sm:$0x1] %v1036
        %1049 = vst [vmem:[%s984 + $0x38] sm:$0x1] %v1037
        %s1050 = sadd.s32 %s147, 12
        %s1051 = sld [smem:[#allocation3 + %s1050]]
        %p1052 = scmp.gt.s32.totalorder %s1051, 0
        %s1053 = scalar_select %p1052, %s1051, 0
        %p1054 = scmp.lt.s32.totalorder %s1053, 9
        %s1055 = scalar_select %p1054, %s1053, 9
        %s1056 = scalar_lea.vmem %s145, 3840
        %1057 = vst [vmem:[%s1056] sm:$0xff] %v148
        %1058 = vst [vmem:[%s1056 + $0x8] sm:$0xff] %v149
        %1059 = vst [vmem:[%s1056 + $0x10] sm:$0xff] %v150
        %1060 = vst [vmem:[%s1056 + $0x18] sm:$0xff] %v151
        %1061 = vst [vmem:[%s1056 + $0x20] sm:$0xff] %v152
        %1062 = vst [vmem:[%s1056 + $0x28] sm:$0xff] %v153
        %1063 = vst [vmem:[%s1056 + $0x30] sm:$0xff] %v154
        %1064 = vst [vmem:[%s1056 + $0x38] sm:$0xff] %v155
        %1065 = vst [vmem:[%s1056 + $0x40] sm:$0xff] %v156
        %1066 = vst [vmem:[%s1056 + $0x48] sm:$0xff] %v157
        %1067 = vst [vmem:[%s1056 + $0x50] sm:$0xff] %v158
        %1068 = vst [vmem:[%s1056 + $0x58] sm:$0xff] %v159
        %1069 = vst [vmem:[%s1056 + $0x60] sm:$0xff] %v160
        %1070 = vst [vmem:[%s1056 + $0x68] sm:$0xff] %v161
        %1071 = vst [vmem:[%s1056 + $0x70] sm:$0xff] %v162
        %1072 = vst [vmem:[%s1056 + $0x78] sm:$0xff] %v163
        %1073 = vst [vmem:[%s1056 + $0x80] sm:$0xff] %v164
        %1074 = vst [vmem:[%s1056 + $0x88] sm:$0xff] %v165
        %1075 = vst [vmem:[%s1056 + $0x90] sm:$0xff] %v166
        %1076 = vst [vmem:[%s1056 + $0x98] sm:$0xff] %v167
        %1077 = vst [vmem:[%s1056 + $0xa0] sm:$0xff] %v168
        %1078 = vst [vmem:[%s1056 + $0xa8] sm:$0xff] %v169
        %1079 = vst [vmem:[%s1056 + $0xb0] sm:$0xff] %v170
        %1080 = vst [vmem:[%s1056 + $0xb8] sm:$0xff] %v171
        %1081 = vst [vmem:[%s1056 + $0xc0] sm:$0xff] %v172
        %1082 = vst [vmem:[%s1056 + $0xc8] sm:$0xff] %v173
        %1083 = vst [vmem:[%s1056 + $0xd0] sm:$0xff] %v174
        %1084 = vst [vmem:[%s1056 + $0xd8] sm:$0xff] %v175
        %1085 = vst [vmem:[%s1056 + $0xe0] sm:$0xff] %v176
        %1086 = vst [vmem:[%s1056 + $0xe8] sm:$0xff] %v177
        %1087 = vst [vmem:[%s1056 + $0xf0] sm:$0xff] %v178
        %1088 = vst [vmem:[%s1056 + $0xf8] sm:$0xff] %v179
        %1089 = vst [vmem:[%s1056 + $0x100] sm:$0xff] %v180
        %1090 = vst [vmem:[%s1056 + $0x108] sm:$0xff] %v181
        %1091 = vst [vmem:[%s1056 + $0x110] sm:$0xff] %v182
        %1092 = vst [vmem:[%s1056 + $0x118] sm:$0xff] %v183
        %1093 = vst [vmem:[%s1056 + $0x120] sm:$0x1f] %v184
        %1094 = vst [vmem:[%s1056 + $0x128] sm:$0x1f] %v185
        %1095 = vst [vmem:[%s1056 + $0x130] sm:$0x1f] %v186
        %1096 = vst [vmem:[%s1056 + $0x138] sm:$0x1f] %v187
        %s1097 = smul.u32 %s1055, 4
        %s1098 = smul.addr %s1097, 4
        %s1099 = scalar_lea.vmem [#allocation4], %s1098
        %v1100 = vld [vmem:[%s1099] sm:$0xff]
        %v1101 = vld [vmem:[%s1099 + $0x8] sm:$0xff]
        %v1104 = vcombine.high %v1100, %v1100
        %v1105 = vcombine.high %v1101, %v1101
        %v1106 = vrot.slane %v1100, 3
        %v1107 = vrot.slane %v1104, 3
        %v1108 = vrot.slane %v1101, 3
        %v1109 = vrot.slane %v1105, 3
        %1114 = vst [vmem:[%s1056] sm:$0xe0] %v1106
        %1115 = vst [vmem:[%s1056 + $0x8] sm:$0xe0] %v1107
        %1116 = vst [vmem:[%s1056 + $0x10] sm:$0xe0] %v1108
        %1117 = vst [vmem:[%s1056 + $0x18] sm:$0xe0] %v1109
        %1118 = vst [vmem:[%s1056 + $0x20] sm:$0x1] %v1106
        %1119 = vst [vmem:[%s1056 + $0x28] sm:$0x1] %v1107
        %1120 = vst [vmem:[%s1056 + $0x30] sm:$0x1] %v1108
        %1121 = vst [vmem:[%s1056 + $0x38] sm:$0x1] %v1109
        %s1122 = sadd.s32 %s147, 13
        %s1123 = sld [smem:[#allocation3 + %s1122]]
        %p1124 = scmp.gt.s32.totalorder %s1123, 0
        %s1125 = scalar_select %p1124, %s1123, 0
        %p1126 = scmp.lt.s32.totalorder %s1125, 9
        %s1127 = scalar_select %p1126, %s1125, 9
        %s1128 = scalar_lea.vmem %s145, 4160
        %1129 = vst [vmem:[%s1128] sm:$0xff] %v148
        %1130 = vst [vmem:[%s1128 + $0x8] sm:$0xff] %v149
        %1131 = vst [vmem:[%s1128 + $0x10] sm:$0xff] %v150
        %1132 = vst [vmem:[%s1128 + $0x18] sm:$0xff] %v151
        %1133 = vst [vmem:[%s1128 + $0x20] sm:$0xff] %v152
        %1134 = vst [vmem:[%s1128 + $0x28] sm:$0xff] %v153
        %1135 = vst [vmem:[%s1128 + $0x30] sm:$0xff] %v154
        %1136 = vst [vmem:[%s1128 + $0x38] sm:$0xff] %v155
        %1137 = vst [vmem:[%s1128 + $0x40] sm:$0xff] %v156
        %1138 = vst [vmem:[%s1128 + $0x48] sm:$0xff] %v157
        %1139 = vst [vmem:[%s1128 + $0x50] sm:$0xff] %v158
        %1140 = vst [vmem:[%s1128 + $0x58] sm:$0xff] %v159
        %1141 = vst [vmem:[%s1128 + $0x60] sm:$0xff] %v160
        %1142 = vst [vmem:[%s1128 + $0x68] sm:$0xff] %v161
        %1143 = vst [vmem:[%s1128 + $0x70] sm:$0xff] %v162
        %1144 = vst [vmem:[%s1128 + $0x78] sm:$0xff] %v163
        %1145 = vst [vmem:[%s1128 + $0x80] sm:$0xff] %v164
        %1146 = vst [vmem:[%s1128 + $0x88] sm:$0xff] %v165
        %1147 = vst [vmem:[%s1128 + $0x90] sm:$0xff] %v166
        %1148 = vst [vmem:[%s1128 + $0x98] sm:$0xff] %v167
        %1149 = vst [vmem:[%s1128 + $0xa0] sm:$0xff] %v168
        %1150 = vst [vmem:[%s1128 + $0xa8] sm:$0xff] %v169
        %1151 = vst [vmem:[%s1128 + $0xb0] sm:$0xff] %v170
        %1152 = vst [vmem:[%s1128 + $0xb8] sm:$0xff] %v171
        %1153 = vst [vmem:[%s1128 + $0xc0] sm:$0xff] %v172
        %1154 = vst [vmem:[%s1128 + $0xc8] sm:$0xff] %v173
        %1155 = vst [vmem:[%s1128 + $0xd0] sm:$0xff] %v174
        %1156 = vst [vmem:[%s1128 + $0xd8] sm:$0xff] %v175
        %1157 = vst [vmem:[%s1128 + $0xe0] sm:$0xff] %v176
        %1158 = vst [vmem:[%s1128 + $0xe8] sm:$0xff] %v177
        %1159 = vst [vmem:[%s1128 + $0xf0] sm:$0xff] %v178
        %1160 = vst [vmem:[%s1128 + $0xf8] sm:$0xff] %v179
        %1161 = vst [vmem:[%s1128 + $0x100] sm:$0xff] %v180
        %1162 = vst [vmem:[%s1128 + $0x108] sm:$0xff] %v181
        %1163 = vst [vmem:[%s1128 + $0x110] sm:$0xff] %v182
        %1164 = vst [vmem:[%s1128 + $0x118] sm:$0xff] %v183
        %1165 = vst [vmem:[%s1128 + $0x120] sm:$0x1f] %v184
        %1166 = vst [vmem:[%s1128 + $0x128] sm:$0x1f] %v185
        %1167 = vst [vmem:[%s1128 + $0x130] sm:$0x1f] %v186
        %1168 = vst [vmem:[%s1128 + $0x138] sm:$0x1f] %v187
        %s1169 = smul.u32 %s1127, 4
        %s1170 = smul.addr %s1169, 4
        %s1171 = scalar_lea.vmem [#allocation4], %s1170
        %v1172 = vld [vmem:[%s1171] sm:$0xff]
        %v1173 = vld [vmem:[%s1171 + $0x8] sm:$0xff]
        %v1176 = vcombine.high %v1172, %v1172
        %v1177 = vcombine.high %v1173, %v1173
        %v1178 = vrot.slane %v1172, 3
        %v1179 = vrot.slane %v1176, 3
        %v1180 = vrot.slane %v1173, 3
        %v1181 = vrot.slane %v1177, 3
        %1186 = vst [vmem:[%s1128] sm:$0xe0] %v1178
        %1187 = vst [vmem:[%s1128 + $0x8] sm:$0xe0] %v1179
        %1188 = vst [vmem:[%s1128 + $0x10] sm:$0xe0] %v1180
        %1189 = vst [vmem:[%s1128 + $0x18] sm:$0xe0] %v1181
        %1190 = vst [vmem:[%s1128 + $0x20] sm:$0x1] %v1178
        %1191 = vst [vmem:[%s1128 + $0x28] sm:$0x1] %v1179
        %1192 = vst [vmem:[%s1128 + $0x30] sm:$0x1] %v1180
        %1193 = vst [vmem:[%s1128 + $0x38] sm:$0x1] %v1181
        %s1194 = sadd.s32 %s147, 14
        %s1195 = sld [smem:[#allocation3 + %s1194]]
        %p1196 = scmp.gt.s32.totalorder %s1195, 0
        %s1197 = scalar_select %p1196, %s1195, 0
        %p1198 = scmp.lt.s32.totalorder %s1197, 9
        %s1199 = scalar_select %p1198, %s1197, 9
        %s1200 = scalar_lea.vmem %s145, 4480
        %1201 = vst [vmem:[%s1200] sm:$0xff] %v148
        %1202 = vst [vmem:[%s1200 + $0x8] sm:$0xff] %v149
        %1203 = vst [vmem:[%s1200 + $0x10] sm:$0xff] %v150
        %1204 = vst [vmem:[%s1200 + $0x18] sm:$0xff] %v151
        %1205 = vst [vmem:[%s1200 + $0x20] sm:$0xff] %v152
        %1206 = vst [vmem:[%s1200 + $0x28] sm:$0xff] %v153
        %1207 = vst [vmem:[%s1200 + $0x30] sm:$0xff] %v154
        %1208 = vst [vmem:[%s1200 + $0x38] sm:$0xff] %v155
        %1209 = vst [vmem:[%s1200 + $0x40] sm:$0xff] %v156
        %1210 = vst [vmem:[%s1200 + $0x48] sm:$0xff] %v157
        %1211 = vst [vmem:[%s1200 + $0x50] sm:$0xff] %v158
        %1212 = vst [vmem:[%s1200 + $0x58] sm:$0xff] %v159
        %1213 = vst [vmem:[%s1200 + $0x60] sm:$0xff] %v160
        %1214 = vst [vmem:[%s1200 + $0x68] sm:$0xff] %v161
        %1215 = vst [vmem:[%s1200 + $0x70] sm:$0xff] %v162
        %1216 = vst [vmem:[%s1200 + $0x78] sm:$0xff] %v163
        %1217 = vst [vmem:[%s1200 + $0x80] sm:$0xff] %v164
        %1218 = vst [vmem:[%s1200 + $0x88] sm:$0xff] %v165
        %1219 = vst [vmem:[%s1200 + $0x90] sm:$0xff] %v166
        %1220 = vst [vmem:[%s1200 + $0x98] sm:$0xff] %v167
        %1221 = vst [vmem:[%s1200 + $0xa0] sm:$0xff] %v168
        %1222 = vst [vmem:[%s1200 + $0xa8] sm:$0xff] %v169
        %1223 = vst [vmem:[%s1200 + $0xb0] sm:$0xff] %v170
        %1224 = vst [vmem:[%s1200 + $0xb8] sm:$0xff] %v171
        %1225 = vst [vmem:[%s1200 + $0xc0] sm:$0xff] %v172
        %1226 = vst [vmem:[%s1200 + $0xc8] sm:$0xff] %v173
        %1227 = vst [vmem:[%s1200 + $0xd0] sm:$0xff] %v174
        %1228 = vst [vmem:[%s1200 + $0xd8] sm:$0xff] %v175
        %1229 = vst [vmem:[%s1200 + $0xe0] sm:$0xff] %v176
        %1230 = vst [vmem:[%s1200 + $0xe8] sm:$0xff] %v177
        %1231 = vst [vmem:[%s1200 + $0xf0] sm:$0xff] %v178
        %1232 = vst [vmem:[%s1200 + $0xf8] sm:$0xff] %v179
        %1233 = vst [vmem:[%s1200 + $0x100] sm:$0xff] %v180
        %1234 = vst [vmem:[%s1200 + $0x108] sm:$0xff] %v181
        %1235 = vst [vmem:[%s1200 + $0x110] sm:$0xff] %v182
        %1236 = vst [vmem:[%s1200 + $0x118] sm:$0xff] %v183
        %1237 = vst [vmem:[%s1200 + $0x120] sm:$0x1f] %v184
        %1238 = vst [vmem:[%s1200 + $0x128] sm:$0x1f] %v185
        %1239 = vst [vmem:[%s1200 + $0x130] sm:$0x1f] %v186
        %1240 = vst [vmem:[%s1200 + $0x138] sm:$0x1f] %v187
        %s1241 = smul.u32 %s1199, 4
        %s1242 = smul.addr %s1241, 4
        %s1243 = scalar_lea.vmem [#allocation4], %s1242
        %v1244 = vld [vmem:[%s1243] sm:$0xff]
        %v1245 = vld [vmem:[%s1243 + $0x8] sm:$0xff]
        %v1248 = vcombine.high %v1244, %v1244
        %v1249 = vcombine.high %v1245, %v1245
        %v1250 = vrot.slane %v1244, 3
        %v1251 = vrot.slane %v1248, 3
        %v1252 = vrot.slane %v1245, 3
        %v1253 = vrot.slane %v1249, 3
        %1258 = vst [vmem:[%s1200] sm:$0xe0] %v1250
        %1259 = vst [vmem:[%s1200 + $0x8] sm:$0xe0] %v1251
        %1260 = vst [vmem:[%s1200 + $0x10] sm:$0xe0] %v1252
        %1261 = vst [vmem:[%s1200 + $0x18] sm:$0xe0] %v1253
        %1262 = vst [vmem:[%s1200 + $0x20] sm:$0x1] %v1250
        %1263 = vst [vmem:[%s1200 + $0x28] sm:$0x1] %v1251
        %1264 = vst [vmem:[%s1200 + $0x30] sm:$0x1] %v1252
        %1265 = vst [vmem:[%s1200 + $0x38] sm:$0x1] %v1253
        %s1266 = sadd.s32 %s147, 15
        %s1267 = sld [smem:[#allocation3 + %s1266]]
        %p1268 = scmp.gt.s32.totalorder %s1267, 0
        %s1269 = scalar_select %p1268, %s1267, 0
        %p1270 = scmp.lt.s32.totalorder %s1269, 9
        %s1271 = scalar_select %p1270, %s1269, 9
        %s1272 = scalar_lea.vmem %s145, 4800
        %1273 = vst [vmem:[%s1272] sm:$0xff] %v148
        %1274 = vst [vmem:[%s1272 + $0x8] sm:$0xff] %v149
        %1275 = vst [vmem:[%s1272 + $0x10] sm:$0xff] %v150
        %1276 = vst [vmem:[%s1272 + $0x18] sm:$0xff] %v151
        %1277 = vst [vmem:[%s1272 + $0x20] sm:$0xff] %v152
        %1278 = vst [vmem:[%s1272 + $0x28] sm:$0xff] %v153
        %1279 = vst [vmem:[%s1272 + $0x30] sm:$0xff] %v154
        %1280 = vst [vmem:[%s1272 + $0x38] sm:$0xff] %v155
        %1281 = vst [vmem:[%s1272 + $0x40] sm:$0xff] %v156
        %1282 = vst [vmem:[%s1272 + $0x48] sm:$0xff] %v157
        %1283 = vst [vmem:[%s1272 + $0x50] sm:$0xff] %v158
        %1284 = vst [vmem:[%s1272 + $0x58] sm:$0xff] %v159
        %1285 = vst [vmem:[%s1272 + $0x60] sm:$0xff] %v160
        %1286 = vst [vmem:[%s1272 + $0x68] sm:$0xff] %v161
        %1287 = vst [vmem:[%s1272 + $0x70] sm:$0xff] %v162
        %1288 = vst [vmem:[%s1272 + $0x78] sm:$0xff] %v163
        %1289 = vst [vmem:[%s1272 + $0x80] sm:$0xff] %v164
        %1290 = vst [vmem:[%s1272 + $0x88] sm:$0xff] %v165
        %1291 = vst [vmem:[%s1272 + $0x90] sm:$0xff] %v166
        %1292 = vst [vmem:[%s1272 + $0x98] sm:$0xff] %v167
        %1293 = vst [vmem:[%s1272 + $0xa0] sm:$0xff] %v168
        %1294 = vst [vmem:[%s1272 + $0xa8] sm:$0xff] %v169
        %1295 = vst [vmem:[%s1272 + $0xb0] sm:$0xff] %v170
        %1296 = vst [vmem:[%s1272 + $0xb8] sm:$0xff] %v171
        %1297 = vst [vmem:[%s1272 + $0xc0] sm:$0xff] %v172
        %1298 = vst [vmem:[%s1272 + $0xc8] sm:$0xff] %v173
        %1299 = vst [vmem:[%s1272 + $0xd0] sm:$0xff] %v174
        %1300 = vst [vmem:[%s1272 + $0xd8] sm:$0xff] %v175
        %1301 = vst [vmem:[%s1272 + $0xe0] sm:$0xff] %v176
        %1302 = vst [vmem:[%s1272 + $0xe8] sm:$0xff] %v177
        %1303 = vst [vmem:[%s1272 + $0xf0] sm:$0xff] %v178
        %1304 = vst [vmem:[%s1272 + $0xf8] sm:$0xff] %v179
        %1305 = vst [vmem:[%s1272 + $0x100] sm:$0xff] %v180
        %1306 = vst [vmem:[%s1272 + $0x108] sm:$0xff] %v181
        %1307 = vst [vmem:[%s1272 + $0x110] sm:$0xff] %v182
        %1308 = vst [vmem:[%s1272 + $0x118] sm:$0xff] %v183
        %1309 = vst [vmem:[%s1272 + $0x120] sm:$0x1f] %v184
        %1310 = vst [vmem:[%s1272 + $0x128] sm:$0x1f] %v185
        %1311 = vst [vmem:[%s1272 + $0x130] sm:$0x1f] %v186
        %1312 = vst [vmem:[%s1272 + $0x138] sm:$0x1f] %v187
        %s1313 = smul.u32 %s1271, 4
        %s1314 = smul.addr %s1313, 4
        %s1315 = scalar_lea.vmem [#allocation4], %s1314
        %v1316 = vld [vmem:[%s1315] sm:$0xff]
        %v1317 = vld [vmem:[%s1315 + $0x8] sm:$0xff]
        %v1320 = vcombine.high %v1316, %v1316
        %v1321 = vcombine.high %v1317, %v1317
        %v1322 = vrot.slane %v1316, 3
        %v1323 = vrot.slane %v1320, 3
        %v1324 = vrot.slane %v1317, 3
        %v1325 = vrot.slane %v1321, 3
        %1330 = vst [vmem:[%s1272] sm:$0xe0] %v1322
        %1331 = vst [vmem:[%s1272 + $0x8] sm:$0xe0] %v1323
        %1332 = vst [vmem:[%s1272 + $0x10] sm:$0xe0] %v1324
        %1333 = vst [vmem:[%s1272 + $0x18] sm:$0xe0] %v1325
        %1334 = vst [vmem:[%s1272 + $0x20] sm:$0x1] %v1322
        %1335 = vst [vmem:[%s1272 + $0x28] sm:$0x1] %v1323
        %1336 = vst [vmem:[%s1272 + $0x30] sm:$0x1] %v1324
        %1337 = vst [vmem:[%s1272 + $0x38] sm:$0x1] %v1325
        %s1338 = smul.u32 16, %s19
        %p1339 = scmp.lt.s32.totalorder %s1338, 31
        %s1340 = scalar_select %p1339, %s1338, 31
        %s1341 = smul.addr %s1340, 40
        %s1342 = smul.addr %s1341, 8
        %s1343 = scalar_lea.vmem %s3, %s1342
        // Predicated region
        $region33: #{prompt_learner_forward.1} parent=27 // pred_check
          %p1344 = pneg %p79
        $region34: #{prompt_learner_forward.1} parent=27 // pred_check_branch
          %1346 = sbr.rel (%p1344) target = $region36
        $region35: #{prompt_learner_forward.1} parent=27 // pred_region
          %s1347 = smul.u32 16, %s19
        $region36: #{prompt_learner_forward.1} parent=27 // pred_fallthru
          _
      $region28: #{prompt_learner_forward.1} parent=5 // pred_fallthru
        _
      %p1348 = scmp.le.s32.totalorder 2, %s14
      // Predicated region
      $region37: #{prompt_learner_forward.1} parent=5 // pred_check
        %p1349 = pneg %p1348
      $region38: #{prompt_learner_forward.1} parent=5 // pred_check_branch
        %1351 = sbr.rel (%p1349) target = $region40
      $region39: #{prompt_learner_forward.1} parent=5 // pred_region
        %s1352 = ssub.s32 %s14, 2
        // Predicated region
        $region41: #{prompt_learner_forward.1} parent=39 // pred_check
          %p1353 = pneg %p85
        $region42: #{prompt_learner_forward.1} parent=39 // pred_check_branch
          %1355 = sbr.rel (%p1353) target = $region44
        $region43: #{prompt_learner_forward.1} parent=39 // pred_region
          %s1356 = smul.u32 16, %s20
          %p1357 = scmp.lt.s32.totalorder %s1356, 31
          %s1358 = scalar_select %p1357, %s1356, 31
          %s1359 = smul.addr %s1358, 40
          %s1360 = smul.addr %s1359, 8
          %s1361 = scalar_lea.vmem %s3, %s1360
        $region44: #{prompt_learner_forward.1} parent=39 // pred_fallthru
          _
      $region40: #{prompt_learner_forward.1} parent=5 // pred_fallthru
        _
    $region6: #{prompt_learner_forward.1} parent=1 // loop_footer
      %s18 = sadd.s32 1, %s14
    $region7: #{prompt_learner_forward.1} parent=1 // loop_footer_branch
      %13 = sbr.rel target = $region3
    $region8: #{prompt_learner_forward.1} parent=1 // loop_exit
      _
    %1362 = vsyncpa [#allocation5], 1
    %s1363 = scalar_lea.sflag [#allocation5], 1
    %1364 = vsyncpa %s1363, 1

</llo_original>
